<compile_context>
chip_gen: v5e
topology: v5e:2x2
jax: 0.10.0
libtpu: 0.0.40
codegen_flags: <defaults>
</compile_context>

<pallas_src>
import functools

import jax
import jax.numpy as jnp
import numpy as np
from jax import lax
from jax.experimental import pallas as pl
from jax.experimental.pallas import tpu as pltpu

EPS = 1e-5


def mpa_kernel(x_ref, y_ref,
               we1y_ref, we1x_ref, we2_ref, be2_ref, gng_ref, gnb_ref,
               gmat_ref, wc1_ref,
               ws1_ref, bs1_ref, lng_ref, lnb_ref, ws2_ref, bs2_ref,
               out_ref, *, group_size, bt):
    C = out_ref.shape[1]
    S = out_ref.shape[2]
    inv_S = jnp.float32(1.0 / S)
    inv_n = jnp.float32(1.0 / (S * group_size))

    # hoist all weight / bias loads out of the batch loop
    we1y = we1y_ref[...]          # (Ch, C) bf16
    we1x = we1x_ref[...]          # (Ch, C) bf16
    we2 = we2_ref[...]            # (C, Ch) bf16
    wc1 = wc1_ref[...]            # (C, C)  bf16
    be2 = be2_ref[...]            # (C, 1)  f32
    gng = gng_ref[...]
    gnb = gnb_ref[...]
    gmat = gmat_ref[...]          # (C, C)  f32 group-membership (stats path stays f32)
    ws1 = ws1_ref[...]            # (A, C)  f32 (tiny N=1 matvec, keep full precision)
    bs1 = bs1_ref[...]
    lng = lng_ref[...]
    lnb = lnb_ref[...]
    ws2 = ws2_ref[...]            # (2C, A) f32
    bs2 = bs2_ref[...]

    def inorm(t):
        # two-pass InstanceNorm over the spatial (lane) axis, biased variance
        mu = jnp.sum(t, axis=1, keepdims=True) * inv_S
        tc = t - mu
        var = jnp.sum(tc * tc, axis=1, keepdims=True) * inv_S
        return tc * lax.rsqrt(var + EPS)

    for b in range(bt):
        # bf16 MXU operands; no f32 copy of x/y is kept resident
        x_bf = x_ref[b].astype(jnp.bfloat16)      # (C, S) == k (original input)
        y_bf = y_ref[b].astype(jnp.bfloat16)      # (C, S) == q (AddAttention)

        # ---- embed(qk): conv1x1 on concat(q, k) split into two bf16 dots,
        #      then InstanceNorm -> ReLU
        t = (jnp.dot(we1y, y_bf, preferred_element_type=jnp.float32)
             + jnp.dot(we1x, x_bf, preferred_element_type=jnp.float32))    # (Ch, S) f32
        t = jnp.maximum(inorm(t), 0.0)

        # ---- conv1x1(+b) -> GroupNorm (two-pass group stats via membership matmul)
        w = jnp.dot(we2, t.astype(jnp.bfloat16),
                    preferred_element_type=jnp.float32) + be2              # (C, S) f32
        sum_c = jnp.sum(w, axis=1, keepdims=True)                          # (C, 1)
        mean_g = jnp.dot(gmat, sum_c, preferred_element_type=jnp.float32) * inv_n
        wc = w - mean_g
        ssq_c = jnp.sum(wc * wc, axis=1, keepdims=True)                    # (C, 1)
        var_g = jnp.dot(gmat, ssq_c, preferred_element_type=jnp.float32) * inv_n
        w = wc * lax.rsqrt(var_g + EPS) * gng + gnb

        # ---- v = InstanceNorm(conv1x1(x)); v = v*w; v = InstanceNorm(v); swish
        v = jnp.dot(wc1, x_bf, preferred_element_type=jnp.float32)         # (C, S) f32
        v = inorm(v)
        v = v * w
        v = inorm(v)
        v = v * jax.nn.sigmoid(v)

        # ---- SE attention over radix=2 branches (x, v)
        xf = x_bf.astype(jnp.float32)                                      # upcast point 1
        x_gap = jnp.sum(xf + v, axis=1, keepdims=True) * inv_S             # (C, 1)
        a = jnp.dot(ws1, x_gap, preferred_element_type=jnp.float32) + bs1  # (A, 1)
        mu = jnp.mean(a, axis=0, keepdims=True)
        var = jnp.mean((a - mu) ** 2, axis=0, keepdims=True)
        a = (a - mu) * lax.rsqrt(var + EPS) * lng + lnb                    # LayerNorm
        a = jnp.maximum(a, 0.0)
        attn = jnp.dot(ws2, a, preferred_element_type=jnp.float32) + bs2   # (2C, 1)
        # rows [0:C] -> radix 0 (weights for x), [C:2C] -> radix 1 (weights for v)
        a0 = attn[:C, :]
        a1 = attn[C:, :]
        m = jnp.maximum(a0, a1)
        e0 = jnp.exp(a0 - m)
        e1 = jnp.exp(a1 - m)
        inv = pl.reciprocal(e0 + e1, approx=True)
        # single lane-dense store of the combined output (upcast point 2 for x)
        out_ref[b] = (xf * (e0 * inv) + v * (e1 * inv)).astype(out_ref.dtype)


def make_params(key, C):
    """Deterministic synthetic parameters in matmul-ready (W @ act) layout.

    Heavy conv weights are stored in bf16 (MXU operands); stats/SE-path
    tensors stay f32.
    """
    share_planes = 8
    factor = 2
    reduction_factor = 4
    radix = 2
    Ch = C // factor
    A = max(C * radix // reduction_factor, 32)
    Cg = share_planes

    ks = jax.random.split(key, 10)
    s = 0.1
    p = {}
    p["we1y"] = (s * jax.random.normal(ks[0], (Ch, C), jnp.float32)).astype(jnp.bfloat16)
    p["we1x"] = (s * jax.random.normal(ks[1], (Ch, C), jnp.float32)).astype(jnp.bfloat16)
    p["we2"] = (s * jax.random.normal(ks[2], (C, Ch), jnp.float32)).astype(jnp.bfloat16)
    p["be2"] = s * jax.random.normal(ks[3], (C, 1), jnp.float32)
    p["gng"] = jnp.ones((C, 1), jnp.float32)                         # GroupNorm affine
    p["gnb"] = jnp.zeros((C, 1), jnp.float32)
    # group membership matrix: gmat[i, j] = 1 if channels i, j share a group
    gidx = np.arange(C) // Cg
    p["gmat"] = jnp.asarray((gidx[:, None] == gidx[None, :]).astype(np.float32))
    p["wc1"] = (s * jax.random.normal(ks[4], (C, C), jnp.float32)).astype(jnp.bfloat16)
    p["ws1"] = s * jax.random.normal(ks[5], (A, C), jnp.float32)     # seconv1
    p["bs1"] = s * jax.random.normal(ks[6], (A, 1), jnp.float32)
    p["lng"] = jnp.ones((A, 1), jnp.float32)                         # LayerNorm affine
    p["lnb"] = jnp.zeros((A, 1), jnp.float32)
    p["ws2"] = s * jax.random.normal(ks[7], (2 * C, A), jnp.float32) # seconv2 [radix0|radix1]
    p["bs2"] = s * jax.random.normal(ks[8], (2 * C, 1), jnp.float32)
    p["_dims"] = (Ch, A, Cg)
    return p


def _vmem_cap_bytes():
    """Generation-aware cap: ~75% of physical per-core VMEM."""
    try:
        phys = int(pltpu.get_tpu_info().vmem_capacity_bytes)
    except Exception:
        phys = 64 * 1024 * 1024          # conservative fallback (v7x per-TC VMEM)
    return (phys * 3) // 4


def _vmem_need_bytes(Bt, C, S, Ch, A, itemsize):
    io = 2 * 3 * Bt * C * S * itemsize          # x, y, out blocks, double-buffered
    live = 6 * Bt * max(C, Ch) * S * 4          # live f32 (C, S) intermediates
    weights = 4 * (3 * Ch * C + 2 * C * C + 3 * A * C + 8 * C + 6 * A)
    return int(2 * (io + live + weights)) + (1 << 20)


def _pick_bt(B, C, S, Ch, A, itemsize, cap_bytes):
    """Largest batch-merge factor that (a) divides B, (b) keeps the grid extent
    >= 2 when B >= 2 (so both v7x TensorCores get work), (c) fits VMEM."""
    min_steps = 2 if B >= 2 else 1
    cands = [bt for bt in range(1, B + 1) if B % bt == 0 and (B // bt) >= min_steps]
    for bt in sorted(cands, reverse=True):
        if _vmem_need_bytes(bt, C, S, Ch, A, itemsize) <= cap_bytes:
            return bt
    return 1


def mpa_forward(x_ncdhw, y_ncdhw, params):
    B, C, H, W, D = x_ncdhw.shape
    S = H * W * D
    Ch, A, Cg = params["_dims"]

    # NCDHW -> channels-first (B, C, S): pure reshape, consume inputs in their
    # incoming dtype (no extra HBM cast pass); the kernel casts to bf16 itself.
    x = x_ncdhw.reshape(B, C, S)
    y = y_ncdhw.reshape(B, C, S)
    itemsize = jnp.dtype(x.dtype).itemsize

    cap = _vmem_cap_bytes()
    Bt = _pick_bt(B, C, S, Ch, A, itemsize, cap)
    nb = B // Bt
    vmem_limit = int(min(max(_vmem_need_bytes(Bt, C, S, Ch, A, itemsize), 8 << 20), cap))

    batch_map = lambda i: (i, 0, 0)
    const_map = lambda i: (0, 0)

    in_specs = [
        pl.BlockSpec((Bt, C, S), batch_map),       # x
        pl.BlockSpec((Bt, C, S), batch_map),       # y
        pl.BlockSpec((Ch, C), const_map),          # we1y (bf16)
        pl.BlockSpec((Ch, C), const_map),          # we1x (bf16)
        pl.BlockSpec((C, Ch), const_map),          # we2  (bf16)
        pl.BlockSpec((C, 1), const_map),           # be2
        pl.BlockSpec((C, 1), const_map),           # gng
        pl.BlockSpec((C, 1), const_map),           # gnb
        pl.BlockSpec((C, C), const_map),           # gmat
        pl.BlockSpec((C, C), const_map),           # wc1  (bf16)
        pl.BlockSpec((A, C), const_map),           # ws1
        pl.BlockSpec((A, 1), const_map),           # bs1
        pl.BlockSpec((A, 1), const_map),           # lng
        pl.BlockSpec((A, 1), const_map),           # lnb
        pl.BlockSpec((2 * C, A), const_map),       # ws2
        pl.BlockSpec((2 * C, 1), const_map),       # bs2
    ]
    out_specs = pl.BlockSpec((Bt, C, S), batch_map)

    kernel = functools.partial(mpa_kernel, group_size=Cg, bt=Bt)
    out = pl.pallas_call(
        kernel,
        out_shape=jax.ShapeDtypeStruct((B, C, S), x.dtype),
        grid=(nb,),
        in_specs=in_specs,
        out_specs=out_specs,
        compiler_params=pltpu.CompilerParams(
            dimension_semantics=("parallel",),
            vmem_limit_bytes=vmem_limit),
    )(x, y,
      params["we1y"], params["we1x"], params["we2"], params["be2"],
      params["gng"], params["gnb"], params["gmat"], params["wc1"],
      params["ws1"], params["bs1"], params["lng"], params["lnb"],
      params["ws2"], params["bs2"])

    # (B, C, S) -> NCDHW (pure reshape)
    return out.reshape(B, C, H, W, D)


def mpa_reference(x_ncdhw, y_ncdhw, params):
    """Pure-JAX reference (same math as the PyTorch module), f32 throughout."""
    B, C, H, W, D = x_ncdhw.shape
    S = H * W * D
    Ch, A, Cg = params["_dims"]
    x = x_ncdhw.reshape(B, C, S).astype(jnp.float32)
    y = y_ncdhw.reshape(B, C, S).astype(jnp.float32)

    we1y = params["we1y"].astype(jnp.float32)
    we1x = params["we1x"].astype(jnp.float32)
    we2 = params["we2"].astype(jnp.float32)
    wc1 = params["wc1"].astype(jnp.float32)

    def inorm(t):  # over spatial axis (per batch, per channel), two-pass
        mu = jnp.mean(t, axis=2, keepdims=True)
        var = jnp.mean((t - mu) ** 2, axis=2, keepdims=True)
        return (t - mu) * lax.rsqrt(var + EPS)

    t = (jnp.einsum("dc,bcs->bds", we1y, y)
         + jnp.einsum("dc,bcs->bds", we1x, x))
    t = jnp.maximum(inorm(t), 0.0)
    w = jnp.einsum("cd,bds->bcs", we2, t) + params["be2"][None]
    # GroupNorm
    G = C // Cg
    wg = w.reshape(B, G, Cg, S)
    mu = jnp.mean(wg, axis=(2, 3), keepdims=True)
    var = jnp.mean((wg - mu) ** 2, axis=(2, 3), keepdims=True)
    w = ((wg - mu) * lax.rsqrt(var + EPS)).reshape(B, C, S)
    w = w * params["gng"][None] + params["gnb"][None]

    v = jnp.einsum("cd,bds->bcs", wc1, x)
    v = inorm(v)
    v = v * w
    v = inorm(v)
    v = v * jax.nn.sigmoid(v)

    x_gap = jnp.mean(x + v, axis=2)                           # (B, C)
    a = jnp.einsum("ac,bc->ba", params["ws1"], x_gap) + params["bs1"][:, 0][None]
    mu = jnp.mean(a, axis=1, keepdims=True)
    var = jnp.mean((a - mu) ** 2, axis=1, keepdims=True)
    a = (a - mu) * lax.rsqrt(var + EPS) * params["lng"][:, 0][None] + params["lnb"][:, 0][None]
    a = jnp.maximum(a, 0.0)
    attn = jnp.einsum("ea,ba->be", params["ws2"], a) + params["bs2"][:, 0][None]   # (B, 2C)
    a0, a1 = attn[:, :C], attn[:, C:]
    m = jnp.maximum(a0, a1)
    e0, e1 = jnp.exp(a0 - m), jnp.exp(a1 - m)
    s = e0 + e1
    out = x * (e0 / s)[..., None] + v * (e1 / s)[..., None]
    return out.reshape(B, C, H, W, D)


if __name__ == "__main__":
    B, C, H, W, D = 2, 16, 8, 8, 8
    key = jax.random.PRNGKey(0)
    kx, ky, kp = jax.random.split(key, 3)
    # inputs arrive as bf16 (upstream layers produce bf16); kernel and
    # reference consume bit-identical inputs
    x = jax.random.normal(kx, (B, C, H, W, D), jnp.float32).astype(jnp.bfloat16)
    y = jax.random.normal(ky, (B, C, H, W, D), jnp.float32).astype(jnp.bfloat16)
    params = make_params(kp, C)

    out = jax.block_until_ready(mpa_forward(x, y, params))
    ref = jax.block_until_ready(mpa_reference(x, y, params))

    if not np.allclose(np.asarray(out, dtype=np.float32), np.asarray(ref),
                       atol=5e-2, rtol=5e-2):
        raise AssertionError("Pallas kernel output does not match JAX reference")

    print("KERNEL_OK")
</pallas_src>

<mosaic_0001>
module attributes {stable_mosaic.version = 11 : i64} {
  func.func @mpa_kernel(%arg0: i32, %arg1: memref<1x16x512xbf16, #tpu.memory_space<vmem>>, %arg2: memref<1x16x512xbf16, #tpu.memory_space<vmem>>, %arg3: memref<8x16xbf16, #tpu.memory_space<vmem>>, %arg4: memref<8x16xbf16, #tpu.memory_space<vmem>>, %arg5: memref<16x8xbf16, #tpu.memory_space<vmem>>, %arg6: memref<16x1xf32, #tpu.memory_space<vmem>>, %arg7: memref<16x1xf32, #tpu.memory_space<vmem>>, %arg8: memref<16x1xf32, #tpu.memory_space<vmem>>, %arg9: memref<16x16xf32, #tpu.memory_space<vmem>>, %arg10: memref<16x16xbf16, #tpu.memory_space<vmem>>, %arg11: memref<32x16xf32, #tpu.memory_space<vmem>>, %arg12: memref<32x1xf32, #tpu.memory_space<vmem>>, %arg13: memref<32x1xf32, #tpu.memory_space<vmem>>, %arg14: memref<32x1xf32, #tpu.memory_space<vmem>>, %arg15: memref<32x32xf32, #tpu.memory_space<vmem>>, %arg16: memref<32x1xf32, #tpu.memory_space<vmem>>, %arg17: memref<1x16x512xbf16, #tpu.memory_space<vmem>>) attributes {dimension_semantics = [#tpu.dimension_semantics<parallel>], iteration_bounds = array<i64: 2>, scalar_prefetch = 0 : i64, scratch_operands = 0 : i64, tpu.core_type = #tpu.core_type<tc>, window_params = [{transform_indices = @transform_0, window_bounds = array<i64: 1, 16, 512>}, {transform_indices = @transform_1, window_bounds = array<i64: 1, 16, 512>}, {pipeline_mode = #tpu.pipeline_mode<synchronous>, transform_indices = @transform_2, window_bounds = array<i64: 8, 16>}, {pipeline_mode = #tpu.pipeline_mode<synchronous>, transform_indices = @transform_3, window_bounds = array<i64: 8, 16>}, {pipeline_mode = #tpu.pipeline_mode<synchronous>, transform_indices = @transform_4, window_bounds = array<i64: 16, 8>}, {pipeline_mode = #tpu.pipeline_mode<synchronous>, transform_indices = @transform_5, window_bounds = array<i64: 16, 1>}, {pipeline_mode = #tpu.pipeline_mode<synchronous>, transform_indices = @transform_6, window_bounds = array<i64: 16, 1>}, {pipeline_mode = #tpu.pipeline_mode<synchronous>, transform_indices = @transform_7, window_bounds = array<i64: 16, 1>}, {pipeline_mode = #tpu.pipeline_mode<synchronous>, transform_indices = @transform_8, window_bounds = array<i64: 16, 16>}, {pipeline_mode = #tpu.pipeline_mode<synchronous>, transform_indices = @transform_9, window_bounds = array<i64: 16, 16>}, {pipeline_mode = #tpu.pipeline_mode<synchronous>, transform_indices = @transform_10, window_bounds = array<i64: 32, 16>}, {pipeline_mode = #tpu.pipeline_mode<synchronous>, transform_indices = @transform_11, window_bounds = array<i64: 32, 1>}, {pipeline_mode = #tpu.pipeline_mode<synchronous>, transform_indices = @transform_12, window_bounds = array<i64: 32, 1>}, {pipeline_mode = #tpu.pipeline_mode<synchronous>, transform_indices = @transform_13, window_bounds = array<i64: 32, 1>}, {pipeline_mode = #tpu.pipeline_mode<synchronous>, transform_indices = @transform_14, window_bounds = array<i64: 32, 32>}, {pipeline_mode = #tpu.pipeline_mode<synchronous>, transform_indices = @transform_15, window_bounds = array<i64: 32, 1>}, {transform_indices = @transform_16, window_bounds = array<i64: 1, 16, 512>}]} {
    %c0 = arith.constant 0 : index
    %c0_0 = arith.constant 0 : index
    %0 = vector.load %arg3[%c0, %c0_0] : memref<8x16xbf16, #tpu.memory_space<vmem>>, vector<8x16xbf16>
    %c0_1 = arith.constant 0 : index
    %c0_2 = arith.constant 0 : index
    %1 = vector.load %arg4[%c0_1, %c0_2] : memref<8x16xbf16, #tpu.memory_space<vmem>>, vector<8x16xbf16>
    %c0_3 = arith.constant 0 : index
    %c0_4 = arith.constant 0 : index
    %2 = vector.load %arg5[%c0_3, %c0_4] : memref<16x8xbf16, #tpu.memory_space<vmem>>, vector<16x8xbf16>
    %c0_5 = arith.constant 0 : index
    %c0_6 = arith.constant 0 : index
    %3 = vector.load %arg10[%c0_5, %c0_6] : memref<16x16xbf16, #tpu.memory_space<vmem>>, vector<16x16xbf16>
    %c0_7 = arith.constant 0 : index
    %c0_8 = arith.constant 0 : index
    %4 = vector.load %arg6[%c0_7, %c0_8] : memref<16x1xf32, #tpu.memory_space<vmem>>, vector<16x1xf32>
    %c0_9 = arith.constant 0 : index
    %c0_10 = arith.constant 0 : index
    %5 = vector.load %arg7[%c0_9, %c0_10] : memref<16x1xf32, #tpu.memory_space<vmem>>, vector<16x1xf32>
    %c0_11 = arith.constant 0 : index
    %c0_12 = arith.constant 0 : index
    %6 = vector.load %arg8[%c0_11, %c0_12] : memref<16x1xf32, #tpu.memory_space<vmem>>, vector<16x1xf32>
    %c0_13 = arith.constant 0 : index
    %c0_14 = arith.constant 0 : index
    %7 = vector.load %arg9[%c0_13, %c0_14] : memref<16x16xf32, #tpu.memory_space<vmem>>, vector<16x16xf32>
    %c0_15 = arith.constant 0 : index
    %c0_16 = arith.constant 0 : index
    %8 = vector.load %arg11[%c0_15, %c0_16] : memref<32x16xf32, #tpu.memory_space<vmem>>, vector<32x16xf32>
    %c0_17 = arith.constant 0 : index
    %c0_18 = arith.constant 0 : index
    %9 = vector.load %arg12[%c0_17, %c0_18] : memref<32x1xf32, #tpu.memory_space<vmem>>, vector<32x1xf32>
    %c0_19 = arith.constant 0 : index
    %c0_20 = arith.constant 0 : index
    %10 = vector.load %arg13[%c0_19, %c0_20] : memref<32x1xf32, #tpu.memory_space<vmem>>, vector<32x1xf32>
    %c0_21 = arith.constant 0 : index
    %c0_22 = arith.constant 0 : index
    %11 = vector.load %arg14[%c0_21, %c0_22] : memref<32x1xf32, #tpu.memory_space<vmem>>, vector<32x1xf32>
    %c0_23 = arith.constant 0 : index
    %c0_24 = arith.constant 0 : index
    %12 = vector.load %arg15[%c0_23, %c0_24] : memref<32x32xf32, #tpu.memory_space<vmem>>, vector<32x32xf32>
    %c0_25 = arith.constant 0 : index
    %c0_26 = arith.constant 0 : index
    %13 = vector.load %arg16[%c0_25, %c0_26] : memref<32x1xf32, #tpu.memory_space<vmem>>, vector<32x1xf32>
    %c0_27 = arith.constant 0 : index
    %c0_28 = arith.constant 0 : index
    %c0_29 = arith.constant 0 : index
    %14 = vector.load %arg1[%c0_27, %c0_28, %c0_29] : memref<1x16x512xbf16, #tpu.memory_space<vmem>>, vector<1x16x512xbf16>
    %15 = vector.shape_cast %14 : vector<1x16x512xbf16> to vector<16x512xbf16>
    %c0_30 = arith.constant 0 : index
    %c0_31 = arith.constant 0 : index
    %c0_32 = arith.constant 0 : index
    %16 = vector.load %arg2[%c0_30, %c0_31, %c0_32] : memref<1x16x512xbf16, #tpu.memory_space<vmem>>, vector<1x16x512xbf16>
    %17 = vector.shape_cast %16 : vector<1x16x512xbf16> to vector<16x512xbf16>
    %cst = arith.constant dense<0.000000e+00> : vector<8x512xf32>
    %18 = tpu.matmul %0, %17, %cst {dimension_numbers = #tpu.dot_dimension_numbers<[1], [0], [0], [1], [0, 0, 1, 1], [], []>} : vector<8x16xbf16>, vector<16x512xbf16>, vector<8x512xf32> -> vector<8x512xf32>
    %cst_33 = arith.constant dense<0.000000e+00> : vector<8x512xf32>
    %19 = tpu.matmul %1, %15, %cst_33 {dimension_numbers = #tpu.dot_dimension_numbers<[1], [0], [0], [1], [0, 0, 1, 1], [], []>} : vector<8x16xbf16>, vector<16x512xbf16>, vector<8x512xf32> -> vector<8x512xf32>
    %20 = arith.addf %18, %19 : vector<8x512xf32>
    %cst_34 = arith.constant dense<0.000000e+00> : vector<8xf32>
    %21 = vector.multi_reduction <add>, %20, %cst_34 [1] : vector<8x512xf32> to vector<8xf32>
    %22 = vector.shape_cast %21 : vector<8xf32> to vector<8x1xf32>
    %cst_35 = arith.constant 0.001953125 : f32
    %23 = vector.broadcast %cst_35 : f32 to vector<8x1xf32>
    %24 = arith.mulf %22, %23 : vector<8x1xf32>
    %25 = vector.broadcast %24 : vector<8x1xf32> to vector<8x512xf32>
    %26 = arith.subf %20, %25 : vector<8x512xf32>
    %27 = arith.mulf %26, %26 : vector<8x512xf32>
    %cst_36 = arith.constant dense<0.000000e+00> : vector<8xf32>
    %28 = vector.multi_reduction <add>, %27, %cst_36 [1] : vector<8x512xf32> to vector<8xf32>
    %29 = vector.shape_cast %28 : vector<8xf32> to vector<8x1xf32>
    %cst_37 = arith.constant 0.001953125 : f32
    %30 = vector.broadcast %cst_37 : f32 to vector<8x1xf32>
    %31 = arith.mulf %29, %30 : vector<8x1xf32>
    %cst_38 = arith.constant 9.99999974E-6 : f32
    %32 = vector.broadcast %cst_38 : f32 to vector<8x1xf32>
    %33 = arith.addf %31, %32 : vector<8x1xf32>
    %34 = math.rsqrt %33 : vector<8x1xf32>
    %35 = vector.broadcast %34 : vector<8x1xf32> to vector<8x512xf32>
    %36 = arith.mulf %26, %35 : vector<8x512xf32>
    %cst_39 = arith.constant 0.000000e+00 : f32
    %37 = vector.broadcast %cst_39 : f32 to vector<8x512xf32>
    %38 = arith.maximumf %36, %37 : vector<8x512xf32>
    %39 = arith.truncf %38 : vector<8x512xf32> to vector<8x512xbf16>
    %cst_40 = arith.constant dense<0.000000e+00> : vector<16x512xf32>
    %40 = tpu.matmul %2, %39, %cst_40 {dimension_numbers = #tpu.dot_dimension_numbers<[1], [0], [0], [1], [0, 0, 1, 1], [], []>} : vector<16x8xbf16>, vector<8x512xbf16>, vector<16x512xf32> -> vector<16x512xf32>
    %41 = vector.broadcast %4 : vector<16x1xf32> to vector<16x512xf32>
    %42 = arith.addf %40, %41 : vector<16x512xf32>
    %cst_41 = arith.constant dense<0.000000e+00> : vector<16xf32>
    %43 = vector.multi_reduction <add>, %42, %cst_41 [1] : vector<16x512xf32> to vector<16xf32>
    %44 = vector.shape_cast %43 : vector<16xf32> to vector<16x1xf32>
    %cst_42 = arith.constant dense<0.000000e+00> : vector<16x1xf32>
    %45 = tpu.matmul %7, %44, %cst_42 {dimension_numbers = #tpu.dot_dimension_numbers<[1], [0], [0], [1], [0, 0, 1, 1], [], []>} : vector<16x16xf32>, vector<16x1xf32>, vector<16x1xf32> -> vector<16x1xf32>
    %cst_43 = arith.constant 2.44140625E-4 : f32
    %46 = vector.broadcast %cst_43 : f32 to vector<16x1xf32>
    %47 = arith.mulf %45, %46 : vector<16x1xf32>
    %48 = vector.broadcast %47 : vector<16x1xf32> to vector<16x512xf32>
    %49 = arith.subf %42, %48 : vector<16x512xf32>
    %50 = arith.mulf %49, %49 : vector<16x512xf32>
    %cst_44 = arith.constant dense<0.000000e+00> : vector<16xf32>
    %51 = vector.multi_reduction <add>, %50, %cst_44 [1] : vector<16x512xf32> to vector<16xf32>
    %52 = vector.shape_cast %51 : vector<16xf32> to vector<16x1xf32>
    %cst_45 = arith.constant dense<0.000000e+00> : vector<16x1xf32>
    %53 = tpu.matmul %7, %52, %cst_45 {dimension_numbers = #tpu.dot_dimension_numbers<[1], [0], [0], [1], [0, 0, 1, 1], [], []>} : vector<16x16xf32>, vector<16x1xf32>, vector<16x1xf32> -> vector<16x1xf32>
    %cst_46 = arith.constant 2.44140625E-4 : f32
    %54 = vector.broadcast %cst_46 : f32 to vector<16x1xf32>
    %55 = arith.mulf %53, %54 : vector<16x1xf32>
    %cst_47 = arith.constant 9.99999974E-6 : f32
    %56 = vector.broadcast %cst_47 : f32 to vector<16x1xf32>
    %57 = arith.addf %55, %56 : vector<16x1xf32>
    %58 = math.rsqrt %57 : vector<16x1xf32>
    %59 = vector.broadcast %58 : vector<16x1xf32> to vector<16x512xf32>
    %60 = arith.mulf %49, %59 : vector<16x512xf32>
    %61 = vector.broadcast %5 : vector<16x1xf32> to vector<16x512xf32>
    %62 = arith.mulf %60, %61 : vector<16x512xf32>
    %63 = vector.broadcast %6 : vector<16x1xf32> to vector<16x512xf32>
    %64 = arith.addf %62, %63 : vector<16x512xf32>
    %cst_48 = arith.constant dense<0.000000e+00> : vector<16x512xf32>
    %65 = tpu.matmul %3, %15, %cst_48 {dimension_numbers = #tpu.dot_dimension_numbers<[1], [0], [0], [1], [0, 0, 1, 1], [], []>} : vector<16x16xbf16>, vector<16x512xbf16>, vector<16x512xf32> -> vector<16x512xf32>
    %cst_49 = arith.constant dense<0.000000e+00> : vector<16xf32>
    %66 = vector.multi_reduction <add>, %65, %cst_49 [1] : vector<16x512xf32> to vector<16xf32>
    %67 = vector.shape_cast %66 : vector<16xf32> to vector<16x1xf32>
    %cst_50 = arith.constant 0.001953125 : f32
    %68 = vector.broadcast %cst_50 : f32 to vector<16x1xf32>
    %69 = arith.mulf %67, %68 : vector<16x1xf32>
    %70 = vector.broadcast %69 : vector<16x1xf32> to vector<16x512xf32>
    %71 = arith.subf %65, %70 : vector<16x512xf32>
    %72 = arith.mulf %71, %71 : vector<16x512xf32>
    %cst_51 = arith.constant dense<0.000000e+00> : vector<16xf32>
    %73 = vector.multi_reduction <add>, %72, %cst_51 [1] : vector<16x512xf32> to vector<16xf32>
    %74 = vector.shape_cast %73 : vector<16xf32> to vector<16x1xf32>
    %cst_52 = arith.constant 0.001953125 : f32
    %75 = vector.broadcast %cst_52 : f32 to vector<16x1xf32>
    %76 = arith.mulf %74, %75 : vector<16x1xf32>
    %cst_53 = arith.constant 9.99999974E-6 : f32
    %77 = vector.broadcast %cst_53 : f32 to vector<16x1xf32>
    %78 = arith.addf %76, %77 : vector<16x1xf32>
    %79 = math.rsqrt %78 : vector<16x1xf32>
    %80 = vector.broadcast %79 : vector<16x1xf32> to vector<16x512xf32>
    %81 = arith.mulf %71, %80 : vector<16x512xf32>
    %82 = arith.mulf %81, %64 : vector<16x512xf32>
    %cst_54 = arith.constant dense<0.000000e+00> : vector<16xf32>
    %83 = vector.multi_reduction <add>, %82, %cst_54 [1] : vector<16x512xf32> to vector<16xf32>
    %84 = vector.shape_cast %83 : vector<16xf32> to vector<16x1xf32>
    %cst_55 = arith.constant 0.001953125 : f32
    %85 = vector.broadcast %cst_55 : f32 to vector<16x1xf32>
    %86 = arith.mulf %84, %85 : vector<16x1xf32>
    %87 = vector.broadcast %86 : vector<16x1xf32> to vector<16x512xf32>
    %88 = arith.subf %82, %87 : vector<16x512xf32>
    %89 = arith.mulf %88, %88 : vector<16x512xf32>
    %cst_56 = arith.constant dense<0.000000e+00> : vector<16xf32>
    %90 = vector.multi_reduction <add>, %89, %cst_56 [1] : vector<16x512xf32> to vector<16xf32>
    %91 = vector.shape_cast %90 : vector<16xf32> to vector<16x1xf32>
    %cst_57 = arith.constant 0.001953125 : f32
    %92 = vector.broadcast %cst_57 : f32 to vector<16x1xf32>
    %93 = arith.mulf %91, %92 : vector<16x1xf32>
    %cst_58 = arith.constant 9.99999974E-6 : f32
    %94 = vector.broadcast %cst_58 : f32 to vector<16x1xf32>
    %95 = arith.addf %93, %94 : vector<16x1xf32>
    %96 = math.rsqrt %95 : vector<16x1xf32>
    %97 = vector.broadcast %96 : vector<16x1xf32> to vector<16x512xf32>
    %98 = arith.mulf %88, %97 : vector<16x512xf32>
    %99 = arith.negf %98 : vector<16x512xf32>
    %100 = math.exp %99 : vector<16x512xf32>
    %cst_59 = arith.constant 1.000000e+00 : f32
    %101 = vector.broadcast %cst_59 : f32 to vector<16x512xf32>
    %102 = arith.addf %101, %100 : vector<16x512xf32>
    %103 = arith.divf %101, %102 : vector<16x512xf32>
    %104 = arith.mulf %98, %103 : vector<16x512xf32>
    %105 = arith.extf %15 : vector<16x512xbf16> to vector<16x512xf32>
    %106 = arith.addf %105, %104 : vector<16x512xf32>
    %cst_60 = arith.constant dense<0.000000e+00> : vector<16xf32>
    %107 = vector.multi_reduction <add>, %106, %cst_60 [1] : vector<16x512xf32> to vector<16xf32>
    %108 = vector.shape_cast %107 : vector<16xf32> to vector<16x1xf32>
    %cst_61 = arith.constant 0.001953125 : f32
    %109 = vector.broadcast %cst_61 : f32 to vector<16x1xf32>
    %110 = arith.mulf %108, %109 : vector<16x1xf32>
    %cst_62 = arith.constant dense<0.000000e+00> : vector<32x1xf32>
    %111 = tpu.matmul %8, %110, %cst_62 {dimension_numbers = #tpu.dot_dimension_numbers<[1], [0], [0], [1], [0, 0, 1, 1], [], []>} : vector<32x16xf32>, vector<16x1xf32>, vector<32x1xf32> -> vector<32x1xf32>
    %112 = arith.addf %111, %9 : vector<32x1xf32>
    %cst_63 = arith.constant dense<0.000000e+00> : vector<1xf32>
    %113 = vector.multi_reduction <add>, %112, %cst_63 [0] : vector<32x1xf32> to vector<1xf32>
    %114 = vector.shape_cast %113 : vector<1xf32> to vector<1x1xf32>
    %cst_64 = arith.constant 3.200000e+01 : f32
    %115 = vector.broadcast %cst_64 : f32 to vector<1x1xf32>
    %116 = arith.divf %114, %115 : vector<1x1xf32>
    %117 = vector.broadcast %116 : vector<1x1xf32> to vector<32x1xf32>
    %118 = arith.subf %112, %117 : vector<32x1xf32>
    %119 = arith.mulf %118, %118 : vector<32x1xf32>
    %cst_65 = arith.constant dense<0.000000e+00> : vector<1xf32>
    %120 = vector.multi_reduction <add>, %119, %cst_65 [0] : vector<32x1xf32> to vector<1xf32>
    %121 = vector.shape_cast %120 : vector<1xf32> to vector<1x1xf32>
    %cst_66 = arith.constant 3.200000e+01 : f32
    %122 = vector.broadcast %cst_66 : f32 to vector<1x1xf32>
    %123 = arith.divf %121, %122 : vector<1x1xf32>
    %124 = vector.broadcast %116 : vector<1x1xf32> to vector<32x1xf32>
    %125 = arith.subf %112, %124 : vector<32x1xf32>
    %cst_67 = arith.constant 9.99999974E-6 : f32
    %126 = vector.broadcast %cst_67 : f32 to vector<1x1xf32>
    %127 = arith.addf %123, %126 : vector<1x1xf32>
    %128 = math.rsqrt %127 : vector<1x1xf32>
    %129 = vector.broadcast %128 : vector<1x1xf32> to vector<32x1xf32>
    %130 = arith.mulf %125, %129 : vector<32x1xf32>
    %131 = arith.mulf %130, %10 : vector<32x1xf32>
    %132 = arith.addf %131, %11 : vector<32x1xf32>
    %cst_68 = arith.constant 0.000000e+00 : f32
    %133 = vector.broadcast %cst_68 : f32 to vector<32x1xf32>
    %134 = arith.maximumf %132, %133 : vector<32x1xf32>
    %cst_69 = arith.constant dense<0.000000e+00> : vector<32x1xf32>
    %135 = tpu.matmul %12, %134, %cst_69 {dimension_numbers = #tpu.dot_dimension_numbers<[1], [0], [0], [1], [0, 0, 1, 1], [], []>} : vector<32x32xf32>, vector<32x1xf32>, vector<32x1xf32> -> vector<32x1xf32>
    %136 = arith.addf %135, %13 : vector<32x1xf32>
    %137 = vector.extract_strided_slice %136 {offsets = [0, 0], sizes = [16, 1], strides = [1, 1]} : vector<32x1xf32> to vector<16x1xf32>
    %138 = vector.extract_strided_slice %136 {offsets = [16, 0], sizes = [16, 1], strides = [1, 1]} : vector<32x1xf32> to vector<16x1xf32>
    %139 = arith.maximumf %137, %138 : vector<16x1xf32>
    %140 = arith.subf %137, %139 : vector<16x1xf32>
    %141 = math.exp %140 : vector<16x1xf32>
    %142 = arith.subf %138, %139 : vector<16x1xf32>
    %143 = math.exp %142 : vector<16x1xf32>
    %144 = arith.addf %141, %143 : vector<16x1xf32>
    %145 = tpu.reciprocal %144 {approx = true} : vector<16x1xf32> -> vector<16x1xf32>
    %146 = arith.mulf %141, %145 : vector<16x1xf32>
    %147 = vector.broadcast %146 : vector<16x1xf32> to vector<16x512xf32>
    %148 = arith.mulf %105, %147 : vector<16x512xf32>
    %149 = arith.mulf %143, %145 : vector<16x1xf32>
    %150 = vector.broadcast %149 : vector<16x1xf32> to vector<16x512xf32>
    %151 = arith.mulf %104, %150 : vector<16x512xf32>
    %152 = arith.addf %148, %151 : vector<16x512xf32>
    %153 = arith.truncf %152 : vector<16x512xf32> to vector<16x512xbf16>
    %c0_70 = arith.constant 0 : index
    %c0_71 = arith.constant 0 : index
    %c0_72 = arith.constant 0 : index
    %154 = vector.load %arg17[%c0_70, %c0_71, %c0_72] : memref<1x16x512xbf16, #tpu.memory_space<vmem>>, vector<1x16x512xbf16>
    %155 = vector.shape_cast %154 : vector<1x16x512xbf16> to vector<16x512xbf16>
    %156 = vector.shape_cast %153 : vector<16x512xbf16> to vector<1x16x512xbf16>
    tpu.vector_store %arg17[%c0_70, %c0_71, %c0_72], %156 {strides = array<i32>} : memref<1x16x512xbf16, #tpu.memory_space<vmem>>, vector<1x16x512xbf16>,
    return
  }
  func.func @transform_0(%arg0: i32) -> (i32, i32, i32) {
    %c0_i32 = arith.constant 0 : i32
    %c0_i32_0 = arith.constant 0 : i32
    %c0_i32_1 = arith.constant 0 : i32
    return %arg0, %c0_i32, %c0_i32_0 : i32, i32, i32
  }
  func.func @transform_1(%arg0: i32) -> (i32, i32, i32) {
    %c0_i32 = arith.constant 0 : i32
    %c0_i32_0 = arith.constant 0 : i32
    %c0_i32_1 = arith.constant 0 : i32
    return %arg0, %c0_i32, %c0_i32_0 : i32, i32, i32
  }
  func.func @transform_2(%arg0: i32) -> (i32, i32) {
    %c0_i32 = arith.constant 0 : i32
    %c0_i32_0 = arith.constant 0 : i32
    %c0_i32_1 = arith.constant 0 : i32
    return %c0_i32, %c0_i32_0 : i32, i32
  }
  func.func @transform_3(%arg0: i32) -> (i32, i32) {
    %c0_i32 = arith.constant 0 : i32
    %c0_i32_0 = arith.constant 0 : i32
    %c0_i32_1 = arith.constant 0 : i32
    return %c0_i32, %c0_i32_0 : i32, i32
  }
  func.func @transform_4(%arg0: i32) -> (i32, i32) {
    %c0_i32 = arith.constant 0 : i32
    %c0_i32_0 = arith.constant 0 : i32
    %c0_i32_1 = arith.constant 0 : i32
    return %c0_i32, %c0_i32_0 : i32, i32
  }
  func.func @transform_5(%arg0: i32) -> (i32, i32) {
    %c0_i32 = arith.constant 0 : i32
    %c0_i32_0 = arith.constant 0 : i32
    %c0_i32_1 = arith.constant 0 : i32
    return %c0_i32, %c0_i32_0 : i32, i32
  }
  func.func @transform_6(%arg0: i32) -> (i32, i32) {
    %c0_i32 = arith.constant 0 : i32
    %c0_i32_0 = arith.constant 0 : i32
    %c0_i32_1 = arith.constant 0 : i32
    return %c0_i32, %c0_i32_0 : i32, i32
  }
  func.func @transform_7(%arg0: i32) -> (i32, i32) {
    %c0_i32 = arith.constant 0 : i32
    %c0_i32_0 = arith.constant 0 : i32
    %c0_i32_1 = arith.constant 0 : i32
    return %c0_i32, %c0_i32_0 : i32, i32
  }
  func.func @transform_8(%arg0: i32) -> (i32, i32) {
    %c0_i32 = arith.constant 0 : i32
    %c0_i32_0 = arith.constant 0 : i32
    %c0_i32_1 = arith.constant 0 : i32
    return %c0_i32, %c0_i32_0 : i32, i32
  }
  func.func @transform_9(%arg0: i32) -> (i32, i32) {
    %c0_i32 = arith.constant 0 : i32
    %c0_i32_0 = arith.constant 0 : i32
    %c0_i32_1 = arith.constant 0 : i32
    return %c0_i32, %c0_i32_0 : i32, i32
  }
  func.func @transform_10(%arg0: i32) -> (i32, i32) {
    %c0_i32 = arith.constant 0 : i32
    %c0_i32_0 = arith.constant 0 : i32
    %c0_i32_1 = arith.constant 0 : i32
    return %c0_i32, %c0_i32_0 : i32, i32
  }
  func.func @transform_11(%arg0: i32) -> (i32, i32) {
    %c0_i32 = arith.constant 0 : i32
    %c0_i32_0 = arith.constant 0 : i32
    %c0_i32_1 = arith.constant 0 : i32
    return %c0_i32, %c0_i32_0 : i32, i32
  }
  func.func @transform_12(%arg0: i32) -> (i32, i32) {
    %c0_i32 = arith.constant 0 : i32
    %c0_i32_0 = arith.constant 0 : i32
    %c0_i32_1 = arith.constant 0 : i32
    return %c0_i32, %c0_i32_0 : i32, i32
  }
  func.func @transform_13(%arg0: i32) -> (i32, i32) {
    %c0_i32 = arith.constant 0 : i32
    %c0_i32_0 = arith.constant 0 : i32
    %c0_i32_1 = arith.constant 0 : i32
    return %c0_i32, %c0_i32_0 : i32, i32
  }
  func.func @transform_14(%arg0: i32) -> (i32, i32) {
    %c0_i32 = arith.constant 0 : i32
    %c0_i32_0 = arith.constant 0 : i32
    %c0_i32_1 = arith.constant 0 : i32
    return %c0_i32, %c0_i32_0 : i32, i32
  }
  func.func @transform_15(%arg0: i32) -> (i32, i32) {
    %c0_i32 = arith.constant 0 : i32
    %c0_i32_0 = arith.constant 0 : i32
    %c0_i32_1 = arith.constant 0 : i32
    return %c0_i32, %c0_i32_0 : i32, i32
  }
  func.func @transform_16(%arg0: i32) -> (i32, i32, i32) {
    %c0_i32 = arith.constant 0 : i32
    %c0_i32_0 = arith.constant 0 : i32
    %c0_i32_1 = arith.constant 0 : i32
    return %arg0, %c0_i32, %c0_i32_0 : i32, i32, i32
  }
}

</mosaic_0001>

<llo_original>
// kernel: tpu_custom_call.1
$region0: #{tpu_custom_call.1}
  #allocation0 [shape = 'u32[]', space=smem, size = 0x4, offset = 0x4, fixed_abs, tag = 'smem constant byte address 0x4 - core index']
  #allocation1 [shape = 'u32[72,128]{1,0:T(1,128)}', space=vmem, size = 0x9000, scoped, tag = 'internal scratch']
  %s0 = inlined_call_operand.vmem [shape: bf16[2,16,512], index: 0, kind: input, shape index: {}]
  %s1 = inlined_call_operand.vmem [shape: bf16[2,16,512], index: 1, kind: input, shape index: {}]
  %s2 = inlined_call_operand.vmem [shape: bf16[8,16], index: 2, kind: input, shape index: {}]
  %s3 = inlined_call_operand.vmem [shape: bf16[8,16], index: 3, kind: input, shape index: {}]
  %s4 = inlined_call_operand.vmem [shape: bf16[16,8], index: 4, kind: input, shape index: {}]
  %s5 = inlined_call_operand.vmem [shape: f32[16,1], index: 5, kind: input, shape index: {}]
  %s6 = inlined_call_operand.vmem [shape: f32[16,1], index: 6, kind: input, shape index: {}]
  %s7 = inlined_call_operand.vmem [shape: f32[16,1], index: 7, kind: input, shape index: {}]
  %s8 = inlined_call_operand.vmem [shape: f32[16,16], index: 8, kind: input, shape index: {}]
  %s9 = inlined_call_operand.vmem [shape: bf16[16,16], index: 9, kind: input, shape index: {}]
  %s10 = inlined_call_operand.vmem [shape: f32[32,16], index: 10, kind: input, shape index: {}]
  %s11 = inlined_call_operand.vmem [shape: f32[32,1], index: 11, kind: input, shape index: {}]
  %s12 = inlined_call_operand.vmem [shape: f32[32,1], index: 12, kind: input, shape index: {}]
  %s13 = inlined_call_operand.vmem [shape: f32[32,1], index: 13, kind: input, shape index: {}]
  %s14 = inlined_call_operand.vmem [shape: f32[32,32], index: 14, kind: input, shape index: {}]
  %s15 = inlined_call_operand.vmem [shape: f32[32,1], index: 15, kind: input, shape index: {}]
  %s16 = inlined_call_operand.hbm [shape: bf16[2,16,512], index: 16, kind: output, shape index: {}]
  %s17 = sld [smem:[#allocation0]]
  $region97: #{tpu_custom_call.1} parent=0
    _
  %s19 = ssub.s32 1, %s17
  %s20 = scalar_select 0, %s19, %s17
  $region1: #{tpu_custom_call.1} parent=0
    #allocation2 [shape = 'u8[32768]{0}', space=vmem, size = 0x8000, scoped, tag = 'output window, operand 0']
    #allocation3 [shape = 's32[2]{0}', space=sflag, size = 0x8, scoped, tag = 'scoped memory for tpu_custom_call.1']
    %21 = vsyncpa [#allocation3], 0
    %s22 = scalar_lea.sflag [#allocation3], 1
    %23 = vsyncpa %s22, 0
    loop: start=0, step=1, limit=4
    $region2: #{tpu_custom_call.1} parent=1 // loop_pre_header
      _
    $region3: #{tpu_custom_call.1} parent=1 // loop_header
      %s25 = sphi 0, %s29
      %p26 = scmp.ge.s32.totalorder %s25, 4
      %s35 = sphi 0, %s37
      %s38 = sphi 0, %s35
      %s39 = sphi 0, %s38
      %s55 = sphi 0, %s39
      %s61 = sphi 0, %s63
      %s64 = sphi 0, %s61
      %s65 = sphi 0, %s64
      %s81 = sphi 0, %s65
      %s85 = sphi 0, %s85
      %s87 = sphi 0, %s85
      %s88 = sphi 0, %s87
      %s102 = sphi 0, %s88
      %s106 = sphi 0, %s106
      %s108 = sphi 0, %s106
      %s109 = sphi 0, %s108
      %s123 = sphi 0, %s109
      %s127 = sphi 0, %s127
      %s129 = sphi 0, %s127
      %s130 = sphi 0, %s129
      %s144 = sphi 0, %s130
      %s148 = sphi 0, %s148
      %s150 = sphi 0, %s148
      %s151 = sphi 0, %s150
      %s165 = sphi 0, %s151
      %s169 = sphi 0, %s169
      %s171 = sphi 0, %s169
      %s172 = sphi 0, %s171
      %s186 = sphi 0, %s172
      %s190 = sphi 0, %s190
      %s192 = sphi 0, %s190
      %s193 = sphi 0, %s192
      %s207 = sphi 0, %s193
      %s211 = sphi 0, %s211
      %s213 = sphi 0, %s211
      %s214 = sphi 0, %s213
      %s228 = sphi 0, %s214
      %s232 = sphi 0, %s232
      %s234 = sphi 0, %s232
      %s235 = sphi 0, %s234
      %s249 = sphi 0, %s235
      %s253 = sphi 0, %s253
      %s255 = sphi 0, %s253
      %s256 = sphi 0, %s255
      %s270 = sphi 0, %s256
      %s274 = sphi 0, %s274
      %s276 = sphi 0, %s274
      %s277 = sphi 0, %s276
      %s291 = sphi 0, %s277
      %s295 = sphi 0, %s295
      %s297 = sphi 0, %s295
      %s298 = sphi 0, %s297
      %s312 = sphi 0, %s298
      %s316 = sphi 0, %s316
      %s318 = sphi 0, %s316
      %s319 = sphi 0, %s318
      %s333 = sphi 0, %s319
      %s337 = sphi 0, %s337
      %s339 = sphi 0, %s337
      %s340 = sphi 0, %s339
      %s354 = sphi 0, %s340
      %s358 = sphi 0, %s358
      %s360 = sphi 0, %s358
      %s361 = sphi 0, %s360
      %s375 = sphi 0, %s361
      %s381 = sphi 0, %s383
      %s384 = sphi 0, %s381
      %s385 = sphi 0, %s384
      %s401 = sphi 0, %s385
    $region4: #{tpu_custom_call.1} parent=1 // loop_header_branch
      %28 = sbr.rel (%p26) target = $region8
    $region5: #{tpu_custom_call.1} parent=1 // loop_body
      %s30 = ssub.s32 %s25, 1
      %s31 = ssub.s32 %s25, 2
      %s32 = sadd.s32 %s25, 1
      %s33 = ssub.s32 %s25, %s32
      %p34 = scmp.eq.s32.totalorder %s33, 0
      %s36 = sadd.s32 %s35, 1
      %s37 = scalar_select %p34, %s35, %s36
      %p40 = pneg %p34
      %p41 = scmp.eq.s32.totalorder %s25, 1
      %p42 = por %p40, %p41
      %p43 = scmp.ne.s32.totalorder %s35, %s38
      %p44 = scmp.eq.s32.totalorder %s25, 0
      %p45 = por %p43, %p44
      %p46 = scmp.ne.s32.totalorder %s35, %s38
      %p47 = scmp.eq.s32.totalorder %s30, 1
      %p48 = por %p46, %p47
      %p49 = scmp.ne.s32.totalorder %s38, %s39
      %p50 = scmp.eq.s32.totalorder %s30, 0
      %p51 = por %p49, %p50
      %p52 = scmp.ne.s32.totalorder %s38, %s39
      %p53 = scmp.eq.s32.totalorder %s31, 1
      %p54 = por %p52, %p53
      %p56 = scmp.ne.s32.totalorder %s39, %s55
      %p57 = scmp.eq.s32.totalorder %s31, 0
      %p58 = por %p56, %p57
      %s59 = ssub.s32 %s25, %s32
      %p60 = scmp.eq.s32.totalorder %s59, 0
      %s62 = sadd.s32 %s61, 1
      %s63 = scalar_select %p60, %s61, %s62
      %p66 = pneg %p60
      %p67 = scmp.eq.s32.totalorder %s25, 1
      %p68 = por %p66, %p67
      %p69 = scmp.ne.s32.totalorder %s61, %s64
      %p70 = scmp.eq.s32.totalorder %s25, 0
      %p71 = por %p69, %p70
      %p72 = scmp.ne.s32.totalorder %s61, %s64
      %p73 = scmp.eq.s32.totalorder %s30, 1
      %p74 = por %p72, %p73
      %p75 = scmp.ne.s32.totalorder %s64, %s65
      %p76 = scmp.eq.s32.totalorder %s30, 0
      %p77 = por %p75, %p76
      %p78 = scmp.ne.s32.totalorder %s64, %s65
      %p79 = scmp.eq.s32.totalorder %s31, 1
      %p80 = por %p78, %p79
      %p82 = scmp.ne.s32.totalorder %s65, %s81
      %p83 = scmp.eq.s32.totalorder %s31, 0
      %p84 = por %p82, %p83
      %s86 = sadd.s32 %s85, 1
      %p89 = scmp.eq.s32.totalorder %s25, 1
      %p90 = scmp.ne.s32.totalorder %s85, %s87
      %p91 = scmp.eq.s32.totalorder %s25, 0
      %p92 = por %p90, %p91
      %p93 = scmp.ne.s32.totalorder %s85, %s87
      %p94 = scmp.eq.s32.totalorder %s30, 1
      %p95 = por %p93, %p94
      %p96 = scmp.ne.s32.totalorder %s87, %s88
      %p97 = scmp.eq.s32.totalorder %s30, 0
      %p98 = por %p96, %p97
      %p99 = scmp.ne.s32.totalorder %s87, %s88
      %p100 = scmp.eq.s32.totalorder %s31, 1
      %p101 = por %p99, %p100
      %p103 = scmp.ne.s32.totalorder %s88, %s102
      %p104 = scmp.eq.s32.totalorder %s31, 0
      %p105 = por %p103, %p104
      %s107 = sadd.s32 %s106, 1
      %p110 = scmp.eq.s32.totalorder %s25, 1
      %p111 = scmp.ne.s32.totalorder %s106, %s108
      %p112 = scmp.eq.s32.totalorder %s25, 0
      %p113 = por %p111, %p112
      %p114 = scmp.ne.s32.totalorder %s106, %s108
      %p115 = scmp.eq.s32.totalorder %s30, 1
      %p116 = por %p114, %p115
      %p117 = scmp.ne.s32.totalorder %s108, %s109
      %p118 = scmp.eq.s32.totalorder %s30, 0
      %p119 = por %p117, %p118
      %p120 = scmp.ne.s32.totalorder %s108, %s109
      %p121 = scmp.eq.s32.totalorder %s31, 1
      %p122 = por %p120, %p121
      %p124 = scmp.ne.s32.totalorder %s109, %s123
      %p125 = scmp.eq.s32.totalorder %s31, 0
      %p126 = por %p124, %p125
      %s128 = sadd.s32 %s127, 1
      %p131 = scmp.eq.s32.totalorder %s25, 1
      %p132 = scmp.ne.s32.totalorder %s127, %s129
      %p133 = scmp.eq.s32.totalorder %s25, 0
      %p134 = por %p132, %p133
      %p135 = scmp.ne.s32.totalorder %s127, %s129
      %p136 = scmp.eq.s32.totalorder %s30, 1
      %p137 = por %p135, %p136
      %p138 = scmp.ne.s32.totalorder %s129, %s130
      %p139 = scmp.eq.s32.totalorder %s30, 0
      %p140 = por %p138, %p139
      %p141 = scmp.ne.s32.totalorder %s129, %s130
      %p142 = scmp.eq.s32.totalorder %s31, 1
      %p143 = por %p141, %p142
      %p145 = scmp.ne.s32.totalorder %s130, %s144
      %p146 = scmp.eq.s32.totalorder %s31, 0
      %p147 = por %p145, %p146
      %s149 = sadd.s32 %s148, 1
      %p152 = scmp.eq.s32.totalorder %s25, 1
      %p153 = scmp.ne.s32.totalorder %s148, %s150
      %p154 = scmp.eq.s32.totalorder %s25, 0
      %p155 = por %p153, %p154
      %p156 = scmp.ne.s32.totalorder %s148, %s150
      %p157 = scmp.eq.s32.totalorder %s30, 1
      %p158 = por %p156, %p157
      %p159 = scmp.ne.s32.totalorder %s150, %s151
      %p160 = scmp.eq.s32.totalorder %s30, 0
      %p161 = por %p159, %p160
      %p162 = scmp.ne.s32.totalorder %s150, %s151
      %p163 = scmp.eq.s32.totalorder %s31, 1
      %p164 = por %p162, %p163
      %p166 = scmp.ne.s32.totalorder %s151, %s165
      %p167 = scmp.eq.s32.totalorder %s31, 0
      %p168 = por %p166, %p167
      %s170 = sadd.s32 %s169, 1
      %p173 = scmp.eq.s32.totalorder %s25, 1
      %p174 = scmp.ne.s32.totalorder %s169, %s171
      %p175 = scmp.eq.s32.totalorder %s25, 0
      %p176 = por %p174, %p175
      %p177 = scmp.ne.s32.totalorder %s169, %s171
      %p178 = scmp.eq.s32.totalorder %s30, 1
      %p179 = por %p177, %p178
      %p180 = scmp.ne.s32.totalorder %s171, %s172
      %p181 = scmp.eq.s32.totalorder %s30, 0
      %p182 = por %p180, %p181
      %p183 = scmp.ne.s32.totalorder %s171, %s172
      %p184 = scmp.eq.s32.totalorder %s31, 1
      %p185 = por %p183, %p184
      %p187 = scmp.ne.s32.totalorder %s172, %s186
      %p188 = scmp.eq.s32.totalorder %s31, 0
      %p189 = por %p187, %p188
      %s191 = sadd.s32 %s190, 1
      %p194 = scmp.eq.s32.totalorder %s25, 1
      %p195 = scmp.ne.s32.totalorder %s190, %s192
      %p196 = scmp.eq.s32.totalorder %s25, 0
      %p197 = por %p195, %p196
      %p198 = scmp.ne.s32.totalorder %s190, %s192
      %p199 = scmp.eq.s32.totalorder %s30, 1
      %p200 = por %p198, %p199
      %p201 = scmp.ne.s32.totalorder %s192, %s193
      %p202 = scmp.eq.s32.totalorder %s30, 0
      %p203 = por %p201, %p202
      %p204 = scmp.ne.s32.totalorder %s192, %s193
      %p205 = scmp.eq.s32.totalorder %s31, 1
      %p206 = por %p204, %p205
      %p208 = scmp.ne.s32.totalorder %s193, %s207
      %p209 = scmp.eq.s32.totalorder %s31, 0
      %p210 = por %p208, %p209
      %s212 = sadd.s32 %s211, 1
      %p215 = scmp.eq.s32.totalorder %s25, 1
      %p216 = scmp.ne.s32.totalorder %s211, %s213
      %p217 = scmp.eq.s32.totalorder %s25, 0
      %p218 = por %p216, %p217
      %p219 = scmp.ne.s32.totalorder %s211, %s213
      %p220 = scmp.eq.s32.totalorder %s30, 1
      %p221 = por %p219, %p220
      %p222 = scmp.ne.s32.totalorder %s213, %s214
      %p223 = scmp.eq.s32.totalorder %s30, 0
      %p224 = por %p222, %p223
      %p225 = scmp.ne.s32.totalorder %s213, %s214
      %p226 = scmp.eq.s32.totalorder %s31, 1
      %p227 = por %p225, %p226
      %p229 = scmp.ne.s32.totalorder %s214, %s228
      %p230 = scmp.eq.s32.totalorder %s31, 0
      %p231 = por %p229, %p230
      %s233 = sadd.s32 %s232, 1
      %p236 = scmp.eq.s32.totalorder %s25, 1
      %p237 = scmp.ne.s32.totalorder %s232, %s234
      %p238 = scmp.eq.s32.totalorder %s25, 0
      %p239 = por %p237, %p238
      %p240 = scmp.ne.s32.totalorder %s232, %s234
      %p241 = scmp.eq.s32.totalorder %s30, 1
      %p242 = por %p240, %p241
      %p243 = scmp.ne.s32.totalorder %s234, %s235
      %p244 = scmp.eq.s32.totalorder %s30, 0
      %p245 = por %p243, %p244
      %p246 = scmp.ne.s32.totalorder %s234, %s235
      %p247 = scmp.eq.s32.totalorder %s31, 1
      %p248 = por %p246, %p247
      %p250 = scmp.ne.s32.totalorder %s235, %s249
      %p251 = scmp.eq.s32.totalorder %s31, 0
      %p252 = por %p250, %p251
      %s254 = sadd.s32 %s253, 1
      %p257 = scmp.eq.s32.totalorder %s25, 1
      %p258 = scmp.ne.s32.totalorder %s253, %s255
      %p259 = scmp.eq.s32.totalorder %s25, 0
      %p260 = por %p258, %p259
      %p261 = scmp.ne.s32.totalorder %s253, %s255
      %p262 = scmp.eq.s32.totalorder %s30, 1
      %p263 = por %p261, %p262
      %p264 = scmp.ne.s32.totalorder %s255, %s256
      %p265 = scmp.eq.s32.totalorder %s30, 0
      %p266 = por %p264, %p265
      %p267 = scmp.ne.s32.totalorder %s255, %s256
      %p268 = scmp.eq.s32.totalorder %s31, 1
      %p269 = por %p267, %p268
      %p271 = scmp.ne.s32.totalorder %s256, %s270
      %p272 = scmp.eq.s32.totalorder %s31, 0
      %p273 = por %p271, %p272
      %s275 = sadd.s32 %s274, 1
      %p278 = scmp.eq.s32.totalorder %s25, 1
      %p279 = scmp.ne.s32.totalorder %s274, %s276
      %p280 = scmp.eq.s32.totalorder %s25, 0
      %p281 = por %p279, %p280
      %p282 = scmp.ne.s32.totalorder %s274, %s276
      %p283 = scmp.eq.s32.totalorder %s30, 1
      %p284 = por %p282, %p283
      %p285 = scmp.ne.s32.totalorder %s276, %s277
      %p286 = scmp.eq.s32.totalorder %s30, 0
      %p287 = por %p285, %p286
      %p288 = scmp.ne.s32.totalorder %s276, %s277
      %p289 = scmp.eq.s32.totalorder %s31, 1
      %p290 = por %p288, %p289
      %p292 = scmp.ne.s32.totalorder %s277, %s291
      %p293 = scmp.eq.s32.totalorder %s31, 0
      %p294 = por %p292, %p293
      %s296 = sadd.s32 %s295, 1
      %p299 = scmp.eq.s32.totalorder %s25, 1
      %p300 = scmp.ne.s32.totalorder %s295, %s297
      %p301 = scmp.eq.s32.totalorder %s25, 0
      %p302 = por %p300, %p301
      %p303 = scmp.ne.s32.totalorder %s295, %s297
      %p304 = scmp.eq.s32.totalorder %s30, 1
      %p305 = por %p303, %p304
      %p306 = scmp.ne.s32.totalorder %s297, %s298
      %p307 = scmp.eq.s32.totalorder %s30, 0
      %p308 = por %p306, %p307
      %p309 = scmp.ne.s32.totalorder %s297, %s298
      %p310 = scmp.eq.s32.totalorder %s31, 1
      %p311 = por %p309, %p310
      %p313 = scmp.ne.s32.totalorder %s298, %s312
      %p314 = scmp.eq.s32.totalorder %s31, 0
      %p315 = por %p313, %p314
      %s317 = sadd.s32 %s316, 1
      %p320 = scmp.eq.s32.totalorder %s25, 1
      %p321 = scmp.ne.s32.totalorder %s316, %s318
      %p322 = scmp.eq.s32.totalorder %s25, 0
      %p323 = por %p321, %p322
      %p324 = scmp.ne.s32.totalorder %s316, %s318
      %p325 = scmp.eq.s32.totalorder %s30, 1
      %p326 = por %p324, %p325
      %p327 = scmp.ne.s32.totalorder %s318, %s319
      %p328 = scmp.eq.s32.totalorder %s30, 0
      %p329 = por %p327, %p328
      %p330 = scmp.ne.s32.totalorder %s318, %s319
      %p331 = scmp.eq.s32.totalorder %s31, 1
      %p332 = por %p330, %p331
      %p334 = scmp.ne.s32.totalorder %s319, %s333
      %p335 = scmp.eq.s32.totalorder %s31, 0
      %p336 = por %p334, %p335
      %s338 = sadd.s32 %s337, 1
      %p341 = scmp.eq.s32.totalorder %s25, 1
      %p342 = scmp.ne.s32.totalorder %s337, %s339
      %p343 = scmp.eq.s32.totalorder %s25, 0
      %p344 = por %p342, %p343
      %p345 = scmp.ne.s32.totalorder %s337, %s339
      %p346 = scmp.eq.s32.totalorder %s30, 1
      %p347 = por %p345, %p346
      %p348 = scmp.ne.s32.totalorder %s339, %s340
      %p349 = scmp.eq.s32.totalorder %s30, 0
      %p350 = por %p348, %p349
      %p351 = scmp.ne.s32.totalorder %s339, %s340
      %p352 = scmp.eq.s32.totalorder %s31, 1
      %p353 = por %p351, %p352
      %p355 = scmp.ne.s32.totalorder %s340, %s354
      %p356 = scmp.eq.s32.totalorder %s31, 0
      %p357 = por %p355, %p356
      %s359 = sadd.s32 %s358, 1
      %p362 = scmp.eq.s32.totalorder %s25, 1
      %p363 = scmp.ne.s32.totalorder %s358, %s360
      %p364 = scmp.eq.s32.totalorder %s25, 0
      %p365 = por %p363, %p364
      %p366 = scmp.ne.s32.totalorder %s358, %s360
      %p367 = scmp.eq.s32.totalorder %s30, 1
      %p368 = por %p366, %p367
      %p369 = scmp.ne.s32.totalorder %s360, %s361
      %p370 = scmp.eq.s32.totalorder %s30, 0
      %p371 = por %p369, %p370
      %p372 = scmp.ne.s32.totalorder %s360, %s361
      %p373 = scmp.eq.s32.totalorder %s31, 1
      %p374 = por %p372, %p373
      %p376 = scmp.ne.s32.totalorder %s361, %s375
      %p377 = scmp.eq.s32.totalorder %s31, 0
      %p378 = por %p376, %p377
      %s379 = ssub.s32 %s25, %s32
      %p380 = scmp.eq.s32.totalorder %s379, 0
      %s382 = sadd.s32 %s381, 1
      %s383 = scalar_select %p380, %s381, %s382
      %p386 = pneg %p380
      %p387 = scmp.eq.s32.totalorder %s25, 1
      %p388 = por %p386, %p387
      %p389 = scmp.ne.s32.totalorder %s381, %s384
      %p390 = scmp.eq.s32.totalorder %s25, 0
      %p391 = por %p389, %p390
      %p392 = scmp.ne.s32.totalorder %s381, %s384
      %p393 = scmp.eq.s32.totalorder %s30, 1
      %p394 = por %p392, %p393
      %p395 = scmp.ne.s32.totalorder %s384, %s385
      %p396 = scmp.eq.s32.totalorder %s30, 0
      %p397 = por %p395, %p396
      %p398 = scmp.ne.s32.totalorder %s384, %s385
      %p399 = scmp.eq.s32.totalorder %s31, 1
      %p400 = por %p398, %p399
      %p402 = scmp.ne.s32.totalorder %s385, %s401
      %p403 = scmp.eq.s32.totalorder %s31, 0
      %p404 = por %p402, %p403
      %p405 = scmp.le.s32.totalorder 1, %s25
      %p406 = scmp.lt.s32.totalorder %s25, 3
      %p407 = pnand %p405, %p406
      %p408 = pneg %p407
      // Predicated region
      $region9: #{tpu_custom_call.1} parent=5 // pred_check
        _
      $region10: #{tpu_custom_call.1} parent=5 // pred_check_branch
        %410 = sbr.rel (%p407) target = $region12
      $region11: #{tpu_custom_call.1} parent=5 // pred_region
        %s411 = ssub.s32 %s25, 1
        // Predicated region
        $region13: #{tpu_custom_call.1} parent=11 // pred_check
          %p412 = pneg %p98
        $region14: #{tpu_custom_call.1} parent=11 // pred_check_branch
          %414 = sbr.rel (%p412) target = $region16
        $region15: #{tpu_custom_call.1} parent=11 // pred_region
          _
        $region16: #{tpu_custom_call.1} parent=11 // pred_fallthru
          _
        // Predicated region
        $region17: #{tpu_custom_call.1} parent=11 // pred_check
          %p415 = pneg %p119
        $region18: #{tpu_custom_call.1} parent=11 // pred_check_branch
          %417 = sbr.rel (%p415) target = $region20
        $region19: #{tpu_custom_call.1} parent=11 // pred_region
          _
        $region20: #{tpu_custom_call.1} parent=11 // pred_fallthru
          _
        // Predicated region
        $region21: #{tpu_custom_call.1} parent=11 // pred_check
          %p418 = pneg %p140
        $region22: #{tpu_custom_call.1} parent=11 // pred_check_branch
          %420 = sbr.rel (%p418) target = $region24
        $region23: #{tpu_custom_call.1} parent=11 // pred_region
          _
        $region24: #{tpu_custom_call.1} parent=11 // pred_fallthru
          _
        // Predicated region
        $region25: #{tpu_custom_call.1} parent=11 // pred_check
          %p421 = pneg %p161
        $region26: #{tpu_custom_call.1} parent=11 // pred_check_branch
          %423 = sbr.rel (%p421) target = $region28
        $region27: #{tpu_custom_call.1} parent=11 // pred_region
          _
        $region28: #{tpu_custom_call.1} parent=11 // pred_fallthru
          _
        // Predicated region
        $region29: #{tpu_custom_call.1} parent=11 // pred_check
          %p424 = pneg %p182
        $region30: #{tpu_custom_call.1} parent=11 // pred_check_branch
          %426 = sbr.rel (%p424) target = $region32
        $region31: #{tpu_custom_call.1} parent=11 // pred_region
          _
        $region32: #{tpu_custom_call.1} parent=11 // pred_fallthru
          _
        // Predicated region
        $region33: #{tpu_custom_call.1} parent=11 // pred_check
          %p427 = pneg %p203
        $region34: #{tpu_custom_call.1} parent=11 // pred_check_branch
          %429 = sbr.rel (%p427) target = $region36
        $region35: #{tpu_custom_call.1} parent=11 // pred_region
          _
        $region36: #{tpu_custom_call.1} parent=11 // pred_fallthru
          _
        // Predicated region
        $region37: #{tpu_custom_call.1} parent=11 // pred_check
          %p430 = pneg %p224
        $region38: #{tpu_custom_call.1} parent=11 // pred_check_branch
          %432 = sbr.rel (%p430) target = $region40
        $region39: #{tpu_custom_call.1} parent=11 // pred_region
          _
        $region40: #{tpu_custom_call.1} parent=11 // pred_fallthru
          _
        // Predicated region
        $region41: #{tpu_custom_call.1} parent=11 // pred_check
          %p433 = pneg %p245
        $region42: #{tpu_custom_call.1} parent=11 // pred_check_branch
          %435 = sbr.rel (%p433) target = $region44
        $region43: #{tpu_custom_call.1} parent=11 // pred_region
          _
        $region44: #{tpu_custom_call.1} parent=11 // pred_fallthru
          _
        // Predicated region
        $region45: #{tpu_custom_call.1} parent=11 // pred_check
          %p436 = pneg %p266
        $region46: #{tpu_custom_call.1} parent=11 // pred_check_branch
          %438 = sbr.rel (%p436) target = $region48
        $region47: #{tpu_custom_call.1} parent=11 // pred_region
          _
        $region48: #{tpu_custom_call.1} parent=11 // pred_fallthru
          _
        // Predicated region
        $region49: #{tpu_custom_call.1} parent=11 // pred_check
          %p439 = pneg %p287
        $region50: #{tpu_custom_call.1} parent=11 // pred_check_branch
          %441 = sbr.rel (%p439) target = $region52
        $region51: #{tpu_custom_call.1} parent=11 // pred_region
          _
        $region52: #{tpu_custom_call.1} parent=11 // pred_fallthru
          _
        // Predicated region
        $region53: #{tpu_custom_call.1} parent=11 // pred_check
          %p442 = pneg %p308
        $region54: #{tpu_custom_call.1} parent=11 // pred_check_branch
          %444 = sbr.rel (%p442) target = $region56
        $region55: #{tpu_custom_call.1} parent=11 // pred_region
          _
        $region56: #{tpu_custom_call.1} parent=11 // pred_fallthru
          _
        // Predicated region
        $region57: #{tpu_custom_call.1} parent=11 // pred_check
          %p445 = pneg %p329
        $region58: #{tpu_custom_call.1} parent=11 // pred_check_branch
          %447 = sbr.rel (%p445) target = $region60
        $region59: #{tpu_custom_call.1} parent=11 // pred_region
          _
        $region60: #{tpu_custom_call.1} parent=11 // pred_fallthru
          _
        // Predicated region
        $region61: #{tpu_custom_call.1} parent=11 // pred_check
          %p448 = pneg %p350
        $region62: #{tpu_custom_call.1} parent=11 // pred_check_branch
          %450 = sbr.rel (%p448) target = $region64
        $region63: #{tpu_custom_call.1} parent=11 // pred_region
          _
        $region64: #{tpu_custom_call.1} parent=11 // pred_fallthru
          _
        // Predicated region
        $region65: #{tpu_custom_call.1} parent=11 // pred_check
          %p451 = pneg %p371
        $region66: #{tpu_custom_call.1} parent=11 // pred_check_branch
          %453 = sbr.rel (%p451) target = $region68
        $region67: #{tpu_custom_call.1} parent=11 // pred_region
          _
        $region68: #{tpu_custom_call.1} parent=11 // pred_fallthru
          _
      $region12: #{tpu_custom_call.1} parent=5 // pred_fallthru
        _
      %p454 = scmp.lt.s32.totalorder %s25, 2
      // Predicated region
      $region69: #{tpu_custom_call.1} parent=5 // pred_check
        %p455 = pneg %p454
      $region70: #{tpu_custom_call.1} parent=5 // pred_check_branch
        %457 = sbr.rel (%p455) target = $region72
      $region71: #{tpu_custom_call.1} parent=5 // pred_region
        // Predicated region
        $region73: #{tpu_custom_call.1} parent=71 // pred_check
          %p458 = pneg %p45
        $region74: #{tpu_custom_call.1} parent=71 // pred_check_branch
          %460 = sbr.rel (%p458) target = $region76
        $region75: #{tpu_custom_call.1} parent=71 // pred_region
          %p461 = scmp.lt.s32.totalorder %s25, 1
          %s462 = scalar_select %p461, %s25, 1
          %s463 = smul.addr %s462, 8
          %s464 = smul.addr %s463, 4
          %s465 = scalar_lea.vmem %s0, %s464
        $region76: #{tpu_custom_call.1} parent=71 // pred_fallthru
          _
        // Predicated region
        $region77: #{tpu_custom_call.1} parent=71 // pred_check
          %p466 = pneg %p71
        $region78: #{tpu_custom_call.1} parent=71 // pred_check_branch
          %468 = sbr.rel (%p466) target = $region80
        $region79: #{tpu_custom_call.1} parent=71 // pred_region
          %p469 = scmp.lt.s32.totalorder %s25, 1
          %s470 = scalar_select %p469, %s25, 1
          %s471 = smul.addr %s470, 8
          %s472 = smul.addr %s471, 4
          %s473 = scalar_lea.vmem %s1, %s472
        $region80: #{tpu_custom_call.1} parent=71 // pred_fallthru
          _
      $region72: #{tpu_custom_call.1} parent=5 // pred_fallthru
        _
      %p474 = scmp.le.s32.totalorder 1, %s25
      %p475 = scmp.lt.s32.totalorder %s25, 3
      %p476 = pnand %p474, %p475
      %p477 = pneg %p476
      // Predicated region
      $region81: #{tpu_custom_call.1} parent=5 // pred_check
        _
      $region82: #{tpu_custom_call.1} parent=5 // pred_check_branch
        %479 = sbr.rel (%p476) target = $region84
      $region83: #{tpu_custom_call.1} parent=5 // pred_region
        %s480 = ssub.s32 %s25, 1
        %p481 = scmp.lt.s32.totalorder %s30, 1
        %s482 = scalar_select %p481, %s30, 1
        %s483 = smul.addr %s482, 8
        %s484 = smul.addr %s483, 4
        %s485 = scalar_lea.vmem %s0, %s484
        %p486 = pneg %p51
        %p487 = pneg %p48
        %p488 = scmp.lt.s32.totalorder %s30, 1
        %s489 = scalar_select %p488, %s30, 1
        %s490 = smul.addr %s489, 8
        %s491 = smul.addr %s490, 4
        %s492 = scalar_lea.vmem %s1, %s491
        %p493 = pneg %p77
        %p494 = pneg %p74
        %p495 = pneg %p98
        %p496 = pneg %p95
        %p497 = pneg %p119
        %p498 = pneg %p116
        %p499 = pneg %p140
        %p500 = pneg %p137
        %p501 = pneg %p161
        %p502 = pneg %p158
        %p503 = pneg %p182
        %p504 = pneg %p179
        %p505 = pneg %p203
        %p506 = pneg %p200
        %p507 = pneg %p224
        %p508 = pneg %p221
        %p509 = pneg %p245
        %p510 = pneg %p242
        %p511 = pneg %p266
        %p512 = pneg %p263
        %p513 = pneg %p287
        %p514 = pneg %p284
        %p515 = pneg %p308
        %p516 = pneg %p305
        %p517 = pneg %p329
        %p518 = pneg %p326
        %p519 = pneg %p350
        %p520 = pneg %p347
        %p521 = pneg %p371
        %p522 = pneg %p368
        %p523 = pneg %p397
        %p524 = pneg %p394
        %s525 = sand.u32 %s384, 1
        %s526 = scalar_lea.sflag [#allocation3], %s525
        %s527 = sand.u32 %s384, 1
        %s528 = smul.addr %s527, 32
        %s529 = scalar_lea.vmem [#allocation2], %s528
        %p530 = scmp.lt.s32.totalorder %s30, 1
        %s531 = scalar_select %p530, %s30, 1
        %s532 = smul.addr %s531, 8
        %s533 = smul.addr %s532, 4
        %s534 = scalar_lea.vmem %s0, %s533
        %p535 = scmp.lt.s32.totalorder %s30, 1
        %s536 = scalar_select %p535, %s30, 1
        %s537 = smul.addr %s536, 8
        %s538 = smul.addr %s537, 4
        %s539 = scalar_lea.vmem %s1, %s538
        %v541 = vld [vmem:[%s2] sm:$0xf]
        %v542 = vld [vmem:[%s3] sm:$0xf]
        %v543 = vld [vmem:[%s4] sm:$0xf]
        %v544 = vld [vmem:[%s4 + $0x4] sm:$0xf]
        %v545 = vld [vmem:[%s9] sm:$0xf]
        %v546 = vld [vmem:[%s9 + $0x4] sm:$0xf]
        %v547 = vld [vmem:[%s5] sm:$0xff]
        %v548 = vld [vmem:[%s5 + $0x8] sm:$0xff]
        %v549 = vld [vmem:[%s6] sm:$0xff]
        %v550 = vld [vmem:[%s6 + $0x8] sm:$0xff]
        %v551 = vld [vmem:[%s7] sm:$0xff]
        %v552 = vld [vmem:[%s7 + $0x8] sm:$0xff]
        %v553 = vld [vmem:[%s8] sm:$0xff]
        %v554 = vld [vmem:[%s8 + $0x8] sm:$0xff]
        %v555 = vld [vmem:[%s10] sm:$0xff]
        %v556 = vld [vmem:[%s10 + $0x8] sm:$0xff]
        %v557 = vld [vmem:[%s10 + $0x10] sm:$0xff]
        %v558 = vld [vmem:[%s10 + $0x18] sm:$0xff]
        %v559 = vld [vmem:[%s11] sm:$0xff]
        %v560 = vld [vmem:[%s11 + $0x8] sm:$0xff]
        %v561 = vld [vmem:[%s11 + $0x10] sm:$0xff]
        %v562 = vld [vmem:[%s11 + $0x18] sm:$0xff]
        %v563 = vld [vmem:[%s12] sm:$0xff]
        %v564 = vld [vmem:[%s12 + $0x8] sm:$0xff]
        %v565 = vld [vmem:[%s12 + $0x10] sm:$0xff]
        %v566 = vld [vmem:[%s12 + $0x18] sm:$0xff]
        %v567 = vld [vmem:[%s13] sm:$0xff]
        %v568 = vld [vmem:[%s13 + $0x8] sm:$0xff]
        %v569 = vld [vmem:[%s13 + $0x10] sm:$0xff]
        %v570 = vld [vmem:[%s13 + $0x18] sm:$0xff]
        %v571 = vld [vmem:[%s14] sm:$0xff]
        %v572 = vld [vmem:[%s14 + $0x8] sm:$0xff]
        %v573 = vld [vmem:[%s14 + $0x10] sm:$0xff]
        %v574 = vld [vmem:[%s14 + $0x18] sm:$0xff]
        %v575 = vld [vmem:[%s15] sm:$0xff]
        %v576 = vld [vmem:[%s15 + $0x8] sm:$0xff]
        %v577 = vld [vmem:[%s15 + $0x10] sm:$0xff]
        %v578 = vld [vmem:[%s15 + $0x18] sm:$0xff]
        %v579 = vld [vmem:[%s534] sm:$0xff]
        %v580 = vld [vmem:[%s534 + $0x8] sm:$0xff]
        %v581 = vld [vmem:[%s534 + $0x10] sm:$0xff]
        %v582 = vld [vmem:[%s534 + $0x18] sm:$0xff]
        %v583 = vld [vmem:[%s539] sm:$0xff]
        %v584 = vld [vmem:[%s539 + $0x8] sm:$0xff]
        %v585 = vld [vmem:[%s539 + $0x10] sm:$0xff]
        %v586 = vld [vmem:[%s539 + $0x18] sm:$0xff]
        %v591 = vunpack.c.l.b16 %v579
        %v592 = vunpack.c.h.b16 %v579
        %v593 = vunpack.c.l.b16 %v580
        %v594 = vunpack.c.h.b16 %v580
        %v595 = vunpack.c.l.b16 %v581
        %v596 = vunpack.c.h.b16 %v581
        %v597 = vunpack.c.l.b16 %v582
        %v598 = vunpack.c.h.b16 %v582
        %v599 = vpack.c.b16 %v595, %v591
        %v600 = vpack.c.b16 %v596, %v592
        %v601 = vpack.c.b16 %v597, %v593
        %v602 = vpack.c.b16 %v598, %v594
        %vm607 = vcmask 130048
        %v609 = vsel %vm607, %v542, 0
        %611 = vmatpush.bf16.msra.mxu0 0
        %612 = vmatpush.bf16.msra.mxu0 0
        %613 = vmatpush.bf16.msra.mxu0 0
        %614 = vmatpush.bf16.msra.mxu0 0
        %615 = vmatpush.bf16.msra.mxu0 0
        %616 = vmatpush.bf16.msra.mxu0 0
        %617 = vmatpush.bf16.msra.mxu0 0
        %618 = vmatpush.bf16.msra.mxu0 %v599
        %619 = vmatmul.bf16.gmra.mxu0 %v609
        %v620 = vpop.f32.mrf.mxu0
        %v621 = vadd.f32 0.0, %v620
        %v622 = vpop.f32.mrf.mxu0
        %623 = vdwg.mxu0
        %624 = vmatpush.bf16.msra.mxu0 0
        %625 = vmatpush.bf16.msra.mxu0 0
        %626 = vmatpush.bf16.msra.mxu0 0
        %627 = vmatpush.bf16.msra.mxu0 0
        %628 = vmatpush.bf16.msra.mxu0 0
        %629 = vmatpush.bf16.msra.mxu0 0
        %630 = vmatpush.bf16.msra.mxu0 0
        %631 = vmatpush.bf16.msra.mxu0 %v600
        %632 = vmatmul.bf16.gmra.mxu0 %v609
        %v633 = vpop.f32.mrf.mxu0
        %v634 = vadd.f32 0.0, %v633
        %v635 = vpop.f32.mrf.mxu0
        %636 = vdwg.mxu0
        %637 = vmatpush.bf16.msra.mxu0 0
        %638 = vmatpush.bf16.msra.mxu0 0
        %639 = vmatpush.bf16.msra.mxu0 0
        %640 = vmatpush.bf16.msra.mxu0 0
        %641 = vmatpush.bf16.msra.mxu0 0
        %642 = vmatpush.bf16.msra.mxu0 0
        %643 = vmatpush.bf16.msra.mxu0 0
        %644 = vmatpush.bf16.msra.mxu0 %v601
        %645 = vmatmul.bf16.gmra.mxu0 %v609
        %v646 = vpop.f32.mrf.mxu0
        %v647 = vadd.f32 0.0, %v646
        %v648 = vpop.f32.mrf.mxu0
        %649 = vdwg.mxu0
        %650 = vmatpush.bf16.msra.mxu0 0
        %651 = vmatpush.bf16.msra.mxu0 0
        %652 = vmatpush.bf16.msra.mxu0 0
        %653 = vmatpush.bf16.msra.mxu0 0
        %654 = vmatpush.bf16.msra.mxu0 0
        %655 = vmatpush.bf16.msra.mxu0 0
        %656 = vmatpush.bf16.msra.mxu0 0
        %657 = vmatpush.bf16.msra.mxu0 %v602
        %658 = vmatmul.bf16.gmra.mxu0 %v609
        %v659 = vpop.f32.mrf.mxu0
        %v660 = vadd.f32 0.0, %v659
        %v661 = vpop.f32.mrf.mxu0
        %662 = vdwg.mxu0
        %v667 = vunpack.c.l.b16 %v583
        %v668 = vunpack.c.h.b16 %v583
        %v669 = vunpack.c.l.b16 %v584
        %v670 = vunpack.c.h.b16 %v584
        %v671 = vunpack.c.l.b16 %v585
        %v672 = vunpack.c.h.b16 %v585
        %v673 = vunpack.c.l.b16 %v586
        %v674 = vunpack.c.h.b16 %v586
        %v675 = vpack.c.b16 %v671, %v667
        %v676 = vpack.c.b16 %v672, %v668
        %v677 = vpack.c.b16 %v673, %v669
        %v678 = vpack.c.b16 %v674, %v670
        %v684 = vsel %vm607, %v541, 0
        %686 = vmatpush.bf16.msra.mxu0 0
        %687 = vmatpush.bf16.msra.mxu0 0
        %688 = vmatpush.bf16.msra.mxu0 0
        %689 = vmatpush.bf16.msra.mxu0 0
        %690 = vmatpush.bf16.msra.mxu0 0
        %691 = vmatpush.bf16.msra.mxu0 0
        %692 = vmatpush.bf16.msra.mxu0 0
        %693 = vmatpush.bf16.msra.mxu0 %v675
        %694 = vmatmul.bf16.gmra.mxu0 %v684
        %v695 = vpop.f32.mrf.mxu0
        %v696 = vadd.f32 %v621, %v695
        %v697 = vpop.f32.mrf.mxu0
        %698 = vdwg.mxu0
        %699 = vmatpush.bf16.msra.mxu0 0
        %700 = vmatpush.bf16.msra.mxu0 0
        %701 = vmatpush.bf16.msra.mxu0 0
        %702 = vmatpush.bf16.msra.mxu0 0
        %703 = vmatpush.bf16.msra.mxu0 0
        %704 = vmatpush.bf16.msra.mxu0 0
        %705 = vmatpush.bf16.msra.mxu0 0
        %706 = vmatpush.bf16.msra.mxu0 %v676
        %707 = vmatmul.bf16.gmra.mxu0 %v684
        %v708 = vpop.f32.mrf.mxu0
        %v709 = vadd.f32 %v634, %v708
        %v710 = vpop.f32.mrf.mxu0
        %711 = vdwg.mxu0
        %712 = vmatpush.bf16.msra.mxu0 0
        %713 = vmatpush.bf16.msra.mxu0 0
        %714 = vmatpush.bf16.msra.mxu0 0
        %715 = vmatpush.bf16.msra.mxu0 0
        %716 = vmatpush.bf16.msra.mxu0 0
        %717 = vmatpush.bf16.msra.mxu0 0
        %718 = vmatpush.bf16.msra.mxu0 0
        %719 = vmatpush.bf16.msra.mxu0 %v677
        %720 = vmatmul.bf16.gmra.mxu0 %v684
        %v721 = vpop.f32.mrf.mxu0
        %v722 = vadd.f32 %v647, %v721
        %v723 = vpop.f32.mrf.mxu0
        %724 = vdwg.mxu0
        %725 = vmatpush.bf16.msra.mxu0 0
        %726 = vmatpush.bf16.msra.mxu0 0
        %727 = vmatpush.bf16.msra.mxu0 0
        %728 = vmatpush.bf16.msra.mxu0 0
        %729 = vmatpush.bf16.msra.mxu0 0
        %730 = vmatpush.bf16.msra.mxu0 0
        %731 = vmatpush.bf16.msra.mxu0 0
        %732 = vmatpush.bf16.msra.mxu0 %v678
        %733 = vmatmul.bf16.gmra.mxu0 %v684
        %v734 = vpop.f32.mrf.mxu0
        %v735 = vadd.f32 %v660, %v734
        %v736 = vpop.f32.mrf.mxu0
        %737 = vdwg.mxu0
        %v738 = vadd.f32 %v696, %v709
        %v739 = vadd.f32 %v738, %v722
        %v740 = vadd.f32 %v739, %v735
        %741 = vadd.xlane.f32.xlu0 %v740
        %v742 = vpop.xlane.xlu0 %741
        %v743 = vmul.f32 %v742, 0.001953125
        %v744 = vsub.f32 %v696, %v743
        %v745 = vsub.f32 %v709, %v743
        %v746 = vsub.f32 %v722, %v743
        %v747 = vsub.f32 %v735, %v743
        %v748 = vmul.f32 %v744, %v744
        %v749 = vmul.f32 %v745, %v745
        %v750 = vmul.f32 %v746, %v746
        %v751 = vmul.f32 %v747, %v747
        %v752 = vadd.f32 %v748, %v749
        %v753 = vadd.f32 %v752, %v750
        %v754 = vadd.f32 %v753, %v751
        %755 = vadd.xlane.f32.xlu0 %v754
        %v756 = vpop.xlane.xlu0 %755
        %v757 = vmul.f32 %v756, 0.001953125
        %v758 = vadd.f32 %v757, 1e-05
        %v759 = vrsqrt.pop %v758
        %v760 = vmul.f32 %v759, %v758
        %v761 = vmul.f32 %v760, %v759
        %v762 = vmul.f32 0.5, %v761
        %v763 = vsub.f32 1.5, %v762
        %v764 = vmul.f32 %v759, %v763
        %vm765 = vweird.f32 %v758
        %vm766 = vweird.f32 %v759
        %vm767 = vmor %vm765, %vm766
        %v768 = vsel %vm767, %v759, %v764
        %v769 = vmul.f32 %v744, %v768
        %v770 = vmul.f32 %v745, %v768
        %v771 = vmul.f32 %v746, %v768
        %v772 = vmul.f32 %v747, %v768
        %v773 = vmax.f32 %v769, 0.0
        %v774 = vmax.f32 %v770, 0.0
        %v775 = vmax.f32 %v771, 0.0
        %v776 = vmax.f32 %v772, 0.0
        %v777 = vpack.c.bf16 %v773, %v773
        %v778 = vpack.c.bf16 %v774, %v774
        %v779 = vpack.c.bf16 %v775, %v775
        %v780 = vpack.c.bf16 %v776, %v776
        %782 = vset.pattern.permute.xlu0 0
        %783 = vperm.xlu0 %782, %v547
        %v784 = vpop.permute.xlu0 %783
        %787 = vset.pattern.permute.xlu0 0
        %788 = vperm.xlu0 %787, %v548
        %v789 = vpop.permute.xlu0 %788
        %v793 = vunpack.c.l.b16 %v543
        %v794 = vunpack.c.l.b16 %v544
        %v795 = vpack.c.b16 %v794, %v793
        %vm796 = vcmask 64512
        %v798 = vsel %vm796, %v795, 0
        %vm800 = vcmask 1043456
        %v802 = vsel %vm800, %v777, 0
        %v805 = vsel %vm800, %v778, 0
        %v808 = vsel %vm800, %v779, 0
        %v811 = vsel %vm800, %v780, 0
        %813 = vmatpush.bf16.msra.mxu0 0
        %814 = vmatpush.bf16.msra.mxu0 0
        %815 = vmatpush.bf16.msra.mxu0 0
        %816 = vmatpush.bf16.msra.mxu0 0
        %817 = vmatpush.bf16.msra.mxu0 0
        %818 = vmatpush.bf16.msra.mxu0 0
        %819 = vmatpush.bf16.msra.mxu0 0
        %820 = vmatpush.bf16.msra.mxu0 %v802
        %821 = vmatmul.bf16.gmra.mxu0 %v798
        %v822 = vpop.f32.mrf.mxu0
        %v823 = vadd.f32 %v784, %v822
        %v824 = vpop.f32.mrf.mxu0
        %v825 = vadd.f32 %v789, %v824
        %826 = vdwg.mxu0
        %827 = vmatpush.bf16.msra.mxu0 0
        %828 = vmatpush.bf16.msra.mxu0 0
        %829 = vmatpush.bf16.msra.mxu0 0
        %830 = vmatpush.bf16.msra.mxu0 0
        %831 = vmatpush.bf16.msra.mxu0 0
        %832 = vmatpush.bf16.msra.mxu0 0
        %833 = vmatpush.bf16.msra.mxu0 0
        %834 = vmatpush.bf16.msra.mxu0 %v805
        %835 = vmatmul.bf16.gmra.mxu0 %v798
        %v836 = vpop.f32.mrf.mxu0
        %v837 = vadd.f32 %v784, %v836
        %v838 = vpop.f32.mrf.mxu0
        %v839 = vadd.f32 %v789, %v838
        %840 = vdwg.mxu0
        %841 = vmatpush.bf16.msra.mxu0 0
        %842 = vmatpush.bf16.msra.mxu0 0
        %843 = vmatpush.bf16.msra.mxu0 0
        %844 = vmatpush.bf16.msra.mxu0 0
        %845 = vmatpush.bf16.msra.mxu0 0
        %846 = vmatpush.bf16.msra.mxu0 0
        %847 = vmatpush.bf16.msra.mxu0 0
        %848 = vmatpush.bf16.msra.mxu0 %v808
        %849 = vmatmul.bf16.gmra.mxu0 %v798
        %v850 = vpop.f32.mrf.mxu0
        %v851 = vadd.f32 %v784, %v850
        %v852 = vpop.f32.mrf.mxu0
        %v853 = vadd.f32 %v789, %v852
        %854 = vdwg.mxu0
        %855 = vmatpush.bf16.msra.mxu0 0
        %856 = vmatpush.bf16.msra.mxu0 0
        %857 = vmatpush.bf16.msra.mxu0 0
        %858 = vmatpush.bf16.msra.mxu0 0
        %859 = vmatpush.bf16.msra.mxu0 0
        %860 = vmatpush.bf16.msra.mxu0 0
        %861 = vmatpush.bf16.msra.mxu0 0
        %862 = vmatpush.bf16.msra.mxu0 %v811
        %863 = vmatmul.bf16.gmra.mxu0 %v798
        %v864 = vpop.f32.mrf.mxu0
        %v865 = vadd.f32 %v784, %v864
        %v866 = vpop.f32.mrf.mxu0
        %v867 = vadd.f32 %v789, %v866
        %868 = vdwg.mxu0
        %v869 = vadd.f32 %v823, %v837
        %v870 = vadd.f32 %v869, %v851
        %v871 = vadd.f32 %v870, %v865
        %872 = vadd.xlane.f32.xlu0 %v871
        %v873 = vpop.xlane.xlu0 %872
        %v874 = vadd.f32 %v825, %v839
        %v875 = vadd.f32 %v874, %v853
        %v876 = vadd.f32 %v875, %v867
        %877 = vadd.xlane.f32.xlu0 %v876
        %v878 = vpop.xlane.xlu0 %877
        %v880 = vsel %vm607, %v553, 0
        %v883 = vsel %vm607, %v554, 0
        %885 = vmatpush.msra.mxu0 0.0
        %886 = vmatpush.msra.mxu0 0.0
        %887 = vmatpush.msra.mxu0 0.0
        %888 = vmatpush.msra.mxu0 0.0
        %889 = vmatpush.msra.mxu0 0.0
        %890 = vmatpush.msra.mxu0 0.0
        %891 = vmatpush.msra.mxu0 0.0
        %892 = vmatpush.msra.mxu0 0.0
        %893 = vmatpush.msra.mxu0 0.0
        %894 = vmatpush.msra.mxu0 0.0
        %895 = vmatpush.msra.mxu0 0.0
        %896 = vmatpush.msra.mxu0 0.0
        %897 = vmatpush.msra.mxu0 0.0
        %898 = vmatpush.msra.mxu0 0.0
        %899 = vmatpush.msra.mxu0 %v878
        %900 = vmatpush.msra.mxu0 %v873
        %901 = vmatmul.f32.gmra.mxu0 %v880
        %v902 = vpop.f32.mrf.mxu0
        %v903 = vadd.f32 0.0, %v902
        %904 = vmatmul.f32.gmra.mxu0 %v883
        %v905 = vpop.f32.mrf.mxu0
        %v906 = vadd.f32 0.0, %v905
        %907 = vdwg.mxu0
        %v908 = vmul.f32 %v903, 0.00024414063
        %v909 = vmul.f32 %v906, 0.00024414063
        %911 = vset.pattern.permute.xlu0 0
        %912 = vperm.xlu0 %911, %v908
        %v913 = vpop.permute.xlu0 %912
        %916 = vset.pattern.permute.xlu0 0
        %917 = vperm.xlu0 %916, %v909
        %v918 = vpop.permute.xlu0 %917
        %v920 = vsub.f32 %v823, %v913
        %v921 = vsub.f32 %v837, %v913
        %v922 = vsub.f32 %v851, %v913
        %v923 = vsub.f32 %v865, %v913
        %v924 = vsub.f32 %v825, %v918
        %v925 = vsub.f32 %v839, %v918
        %v926 = vsub.f32 %v853, %v918
        %v927 = vsub.f32 %v867, %v918
        %v928 = vmul.f32 %v920, %v920
        %v929 = vmul.f32 %v921, %v921
        %v930 = vmul.f32 %v922, %v922
        %v931 = vmul.f32 %v923, %v923
        %v932 = vmul.f32 %v924, %v924
        %v933 = vmul.f32 %v925, %v925
        %v934 = vmul.f32 %v926, %v926
        %v935 = vmul.f32 %v927, %v927
        %v936 = vadd.f32 %v928, %v929
        %v937 = vadd.f32 %v936, %v930
        %v938 = vadd.f32 %v937, %v931
        %939 = vadd.xlane.f32.xlu0 %v938
        %v940 = vpop.xlane.xlu0 %939
        %v941 = vadd.f32 %v932, %v933
        %v942 = vadd.f32 %v941, %v934
        %v943 = vadd.f32 %v942, %v935
        %944 = vadd.xlane.f32.xlu0 %v943
        %v945 = vpop.xlane.xlu0 %944
        %946 = vmatpush.msra.mxu0 0.0
        %947 = vmatpush.msra.mxu0 0.0
        %948 = vmatpush.msra.mxu0 0.0
        %949 = vmatpush.msra.mxu0 0.0
        %950 = vmatpush.msra.mxu0 0.0
        %951 = vmatpush.msra.mxu0 0.0
        %952 = vmatpush.msra.mxu0 0.0
        %953 = vmatpush.msra.mxu0 0.0
        %954 = vmatpush.msra.mxu0 0.0
        %955 = vmatpush.msra.mxu0 0.0
        %956 = vmatpush.msra.mxu0 0.0
        %957 = vmatpush.msra.mxu0 0.0
        %958 = vmatpush.msra.mxu0 0.0
        %959 = vmatpush.msra.mxu0 0.0
        %960 = vmatpush.msra.mxu0 %v945
        %961 = vmatpush.msra.mxu0 %v940
        %962 = vmatmul.f32.gmra.mxu0 %v880
        %v963 = vpop.f32.mrf.mxu0
        %v964 = vadd.f32 0.0, %v963
        %965 = vmatmul.f32.gmra.mxu0 %v883
        %v966 = vpop.f32.mrf.mxu0
        %v967 = vadd.f32 0.0, %v966
        %968 = vdwg.mxu0
        %v969 = vmul.f32 %v964, 0.00024414063
        %v970 = vmul.f32 %v967, 0.00024414063
        %v971 = vadd.f32 %v969, 1e-05
        %v972 = vadd.f32 %v970, 1e-05
        %v973 = vrsqrt.pop %v971
        %v974 = vmul.f32 %v973, %v971
        %v975 = vmul.f32 %v974, %v973
        %v976 = vmul.f32 0.5, %v975
        %v977 = vsub.f32 1.5, %v976
        %v978 = vmul.f32 %v973, %v977
        %vm979 = vweird.f32 %v971
        %vm980 = vweird.f32 %v973
        %vm981 = vmor %vm979, %vm980
        %v982 = vsel %vm981, %v973, %v978
        %v983 = vrsqrt.pop %v972
        %v984 = vmul.f32 %v983, %v972
        %v985 = vmul.f32 %v984, %v983
        %v986 = vmul.f32 0.5, %v985
        %v987 = vsub.f32 1.5, %v986
        %v988 = vmul.f32 %v983, %v987
        %vm989 = vweird.f32 %v972
        %vm990 = vweird.f32 %v983
        %vm991 = vmor %vm989, %vm990
        %v992 = vsel %vm991, %v983, %v988
        %994 = vset.pattern.permute.xlu0 0
        %995 = vperm.xlu0 %994, %v982
        %v996 = vpop.permute.xlu0 %995
        %999 = vset.pattern.permute.xlu0 0
        %1000 = vperm.xlu0 %999, %v992
        %v1001 = vpop.permute.xlu0 %1000
        %v1003 = vmul.f32 %v920, %v996
        %v1004 = vmul.f32 %v921, %v996
        %v1005 = vmul.f32 %v922, %v996
        %v1006 = vmul.f32 %v923, %v996
        %v1007 = vmul.f32 %v924, %v1001
        %v1008 = vmul.f32 %v925, %v1001
        %v1009 = vmul.f32 %v926, %v1001
        %v1010 = vmul.f32 %v927, %v1001
        %1012 = vset.pattern.permute.xlu0 0
        %1013 = vperm.xlu0 %1012, %v549
        %v1014 = vpop.permute.xlu0 %1013
        %1017 = vset.pattern.permute.xlu0 0
        %1018 = vperm.xlu0 %1017, %v550
        %v1019 = vpop.permute.xlu0 %1018
        %v1021 = vmul.f32 %v1003, %v1014
        %v1022 = vmul.f32 %v1004, %v1014
        %v1023 = vmul.f32 %v1005, %v1014
        %v1024 = vmul.f32 %v1006, %v1014
        %v1025 = vmul.f32 %v1007, %v1019
        %v1026 = vmul.f32 %v1008, %v1019
        %v1027 = vmul.f32 %v1009, %v1019
        %v1028 = vmul.f32 %v1010, %v1019
        %1030 = vset.pattern.permute.xlu0 0
        %1031 = vperm.xlu0 %1030, %v551
        %v1032 = vpop.permute.xlu0 %1031
        %1035 = vset.pattern.permute.xlu0 0
        %1036 = vperm.xlu0 %1035, %v552
        %v1037 = vpop.permute.xlu0 %1036
        %v1039 = vadd.f32 %v1021, %v1032
        %v1040 = vadd.f32 %v1022, %v1032
        %v1041 = vadd.f32 %v1023, %v1032
        %v1042 = vadd.f32 %v1024, %v1032
        %v1043 = vadd.f32 %v1025, %v1037
        %v1044 = vadd.f32 %v1026, %v1037
        %v1045 = vadd.f32 %v1027, %v1037
        %v1046 = vadd.f32 %v1028, %v1037
        %v1049 = vunpack.c.l.b16 %v545
        %v1050 = vunpack.c.l.b16 %v546
        %v1051 = vpack.c.b16 %v1050, %v1049
        %v1053 = vsel %vm607, %v1051, 0
        %1055 = vmatpush.bf16.msra.mxu0 0
        %1056 = vmatpush.bf16.msra.mxu0 0
        %1057 = vmatpush.bf16.msra.mxu0 0
        %1058 = vmatpush.bf16.msra.mxu0 0
        %1059 = vmatpush.bf16.msra.mxu0 0
        %1060 = vmatpush.bf16.msra.mxu0 0
        %1061 = vmatpush.bf16.msra.mxu0 0
        %1062 = vmatpush.bf16.msra.mxu0 %v599
        %1063 = vmatmul.bf16.gmra.mxu0 %v1053
        %v1064 = vpop.f32.mrf.mxu0
        %v1065 = vadd.f32 0.0, %v1064
        %v1066 = vpop.f32.mrf.mxu0
        %v1067 = vadd.f32 0.0, %v1066
        %1068 = vdwg.mxu0
        %1069 = vmatpush.bf16.msra.mxu0 0
        %1070 = vmatpush.bf16.msra.mxu0 0
        %1071 = vmatpush.bf16.msra.mxu0 0
        %1072 = vmatpush.bf16.msra.mxu0 0
        %1073 = vmatpush.bf16.msra.mxu0 0
        %1074 = vmatpush.bf16.msra.mxu0 0
        %1075 = vmatpush.bf16.msra.mxu0 0
        %1076 = vmatpush.bf16.msra.mxu0 %v600
        %1077 = vmatmul.bf16.gmra.mxu0 %v1053
        %v1078 = vpop.f32.mrf.mxu0
        %v1079 = vadd.f32 0.0, %v1078
        %v1080 = vpop.f32.mrf.mxu0
        %v1081 = vadd.f32 0.0, %v1080
        %1082 = vdwg.mxu0
        %1083 = vmatpush.bf16.msra.mxu0 0
        %1084 = vmatpush.bf16.msra.mxu0 0
        %1085 = vmatpush.bf16.msra.mxu0 0
        %1086 = vmatpush.bf16.msra.mxu0 0
        %1087 = vmatpush.bf16.msra.mxu0 0
        %1088 = vmatpush.bf16.msra.mxu0 0
        %1089 = vmatpush.bf16.msra.mxu0 0
        %1090 = vmatpush.bf16.msra.mxu0 %v601
        %1091 = vmatmul.bf16.gmra.mxu0 %v1053
        %v1092 = vpop.f32.mrf.mxu0
        %v1093 = vadd.f32 0.0, %v1092
        %v1094 = vpop.f32.mrf.mxu0
        %v1095 = vadd.f32 0.0, %v1094
        %1096 = vdwg.mxu0
        %1097 = vmatpush.bf16.msra.mxu0 0
        %1098 = vmatpush.bf16.msra.mxu0 0
        %1099 = vmatpush.bf16.msra.mxu0 0
        %1100 = vmatpush.bf16.msra.mxu0 0
        %1101 = vmatpush.bf16.msra.mxu0 0
        %1102 = vmatpush.bf16.msra.mxu0 0
        %1103 = vmatpush.bf16.msra.mxu0 0
        %1104 = vmatpush.bf16.msra.mxu0 %v602
        %1105 = vmatmul.bf16.gmra.mxu0 %v1053
        %v1106 = vpop.f32.mrf.mxu0
        %v1107 = vadd.f32 0.0, %v1106
        %v1108 = vpop.f32.mrf.mxu0
        %v1109 = vadd.f32 0.0, %v1108
        %1110 = vdwg.mxu0
        %v1111 = vadd.f32 %v1065, %v1079
        %v1112 = vadd.f32 %v1111, %v1093
        %v1113 = vadd.f32 %v1112, %v1107
        %1114 = vadd.xlane.f32.xlu0 %v1113
        %v1115 = vpop.xlane.xlu0 %1114
        %v1116 = vadd.f32 %v1067, %v1081
        %v1117 = vadd.f32 %v1116, %v1095
        %v1118 = vadd.f32 %v1117, %v1109
        %1119 = vadd.xlane.f32.xlu0 %v1118
        %v1120 = vpop.xlane.xlu0 %1119
        %v1121 = vmul.f32 %v1115, 0.001953125
        %v1122 = vmul.f32 %v1120, 0.001953125
        %v1123 = vsub.f32 %v1065, %v1121
        %v1124 = vsub.f32 %v1079, %v1121
        %v1125 = vsub.f32 %v1093, %v1121
        %v1126 = vsub.f32 %v1107, %v1121
        %v1127 = vsub.f32 %v1067, %v1122
        %v1128 = vsub.f32 %v1081, %v1122
        %v1129 = vsub.f32 %v1095, %v1122
        %v1130 = vsub.f32 %v1109, %v1122
        %v1131 = vmul.f32 %v1123, %v1123
        %v1132 = vmul.f32 %v1124, %v1124
        %v1133 = vmul.f32 %v1125, %v1125
        %v1134 = vmul.f32 %v1126, %v1126
        %v1135 = vmul.f32 %v1127, %v1127
        %v1136 = vmul.f32 %v1128, %v1128
        %v1137 = vmul.f32 %v1129, %v1129
        %v1138 = vmul.f32 %v1130, %v1130
        %v1139 = vadd.f32 %v1131, %v1132
        %v1140 = vadd.f32 %v1139, %v1133
        %v1141 = vadd.f32 %v1140, %v1134
        %1142 = vadd.xlane.f32.xlu0 %v1141
        %v1143 = vpop.xlane.xlu0 %1142
        %v1144 = vadd.f32 %v1135, %v1136
        %v1145 = vadd.f32 %v1144, %v1137
        %v1146 = vadd.f32 %v1145, %v1138
        %1147 = vadd.xlane.f32.xlu0 %v1146
        %v1148 = vpop.xlane.xlu0 %1147
        %v1149 = vmul.f32 %v1143, 0.001953125
        %v1150 = vmul.f32 %v1148, 0.001953125
        %v1151 = vadd.f32 %v1149, 1e-05
        %v1152 = vadd.f32 %v1150, 1e-05
        %v1153 = vrsqrt.pop %v1151
        %v1154 = vmul.f32 %v1153, %v1151
        %v1155 = vmul.f32 %v1154, %v1153
        %v1156 = vmul.f32 0.5, %v1155
        %v1157 = vsub.f32 1.5, %v1156
        %v1158 = vmul.f32 %v1153, %v1157
        %vm1159 = vweird.f32 %v1151
        %vm1160 = vweird.f32 %v1153
        %vm1161 = vmor %vm1159, %vm1160
        %v1162 = vsel %vm1161, %v1153, %v1158
        %v1163 = vrsqrt.pop %v1152
        %v1164 = vmul.f32 %v1163, %v1152
        %v1165 = vmul.f32 %v1164, %v1163
        %v1166 = vmul.f32 0.5, %v1165
        %v1167 = vsub.f32 1.5, %v1166
        %v1168 = vmul.f32 %v1163, %v1167
        %vm1169 = vweird.f32 %v1152
        %vm1170 = vweird.f32 %v1163
        %vm1171 = vmor %vm1169, %vm1170
        %v1172 = vsel %vm1171, %v1163, %v1168
        %v1173 = vmul.f32 %v1123, %v1162
        %v1174 = vmul.f32 %v1124, %v1162
        %v1175 = vmul.f32 %v1125, %v1162
        %v1176 = vmul.f32 %v1126, %v1162
        %v1177 = vmul.f32 %v1127, %v1172
        %v1178 = vmul.f32 %v1128, %v1172
        %v1179 = vmul.f32 %v1129, %v1172
        %v1180 = vmul.f32 %v1130, %v1172
        %v1181 = vmul.f32 %v1173, %v1039
        %v1182 = vmul.f32 %v1174, %v1040
        %v1183 = vmul.f32 %v1175, %v1041
        %v1184 = vmul.f32 %v1176, %v1042
        %v1185 = vmul.f32 %v1177, %v1043
        %v1186 = vmul.f32 %v1178, %v1044
        %v1187 = vmul.f32 %v1179, %v1045
        %v1188 = vmul.f32 %v1180, %v1046
        %v1189 = vadd.f32 %v1181, %v1182
        %v1190 = vadd.f32 %v1189, %v1183
        %v1191 = vadd.f32 %v1190, %v1184
        %1192 = vadd.xlane.f32.xlu0 %v1191
        %v1193 = vpop.xlane.xlu0 %1192
        %v1194 = vadd.f32 %v1185, %v1186
        %v1195 = vadd.f32 %v1194, %v1187
        %v1196 = vadd.f32 %v1195, %v1188
        %1197 = vadd.xlane.f32.xlu0 %v1196
        %v1198 = vpop.xlane.xlu0 %1197
        %v1199 = vmul.f32 %v1193, 0.001953125
        %v1200 = vmul.f32 %v1198, 0.001953125
        %v1201 = vsub.f32 %v1181, %v1199
        %v1202 = vsub.f32 %v1182, %v1199
        %v1203 = vsub.f32 %v1183, %v1199
        %v1204 = vsub.f32 %v1184, %v1199
        %v1205 = vsub.f32 %v1185, %v1200
        %v1206 = vsub.f32 %v1186, %v1200
        %v1207 = vsub.f32 %v1187, %v1200
        %v1208 = vsub.f32 %v1188, %v1200
        %v1209 = vmul.f32 %v1201, %v1201
        %v1210 = vmul.f32 %v1202, %v1202
        %v1211 = vmul.f32 %v1203, %v1203
        %v1212 = vmul.f32 %v1204, %v1204
        %v1213 = vmul.f32 %v1205, %v1205
        %v1214 = vmul.f32 %v1206, %v1206
        %v1215 = vmul.f32 %v1207, %v1207
        %v1216 = vmul.f32 %v1208, %v1208
        %v1217 = vadd.f32 %v1209, %v1210
        %v1218 = vadd.f32 %v1217, %v1211
        %v1219 = vadd.f32 %v1218, %v1212
        %1220 = vadd.xlane.f32.xlu0 %v1219
        %v1221 = vpop.xlane.xlu0 %1220
        %v1222 = vadd.f32 %v1213, %v1214
        %v1223 = vadd.f32 %v1222, %v1215
        %v1224 = vadd.f32 %v1223, %v1216
        %1225 = vadd.xlane.f32.xlu0 %v1224
        %v1226 = vpop.xlane.xlu0 %1225
        %v1227 = vmul.f32 %v1221, 0.001953125
        %v1228 = vmul.f32 %v1226, 0.001953125
        %v1229 = vadd.f32 %v1227, 1e-05
        %v1230 = vadd.f32 %v1228, 1e-05
        %v1231 = vrsqrt.pop %v1229
        %v1232 = vmul.f32 %v1231, %v1229
        %v1233 = vmul.f32 %v1232, %v1231
        %v1234 = vmul.f32 0.5, %v1233
        %v1235 = vsub.f32 1.5, %v1234
        %v1236 = vmul.f32 %v1231, %v1235
        %vm1237 = vweird.f32 %v1229
        %vm1238 = vweird.f32 %v1231
        %vm1239 = vmor %vm1237, %vm1238
        %v1240 = vsel %vm1239, %v1231, %v1236
        %v1241 = vrsqrt.pop %v1230
        %v1242 = vmul.f32 %v1241, %v1230
        %v1243 = vmul.f32 %v1242, %v1241
        %v1244 = vmul.f32 0.5, %v1243
        %v1245 = vsub.f32 1.5, %v1244
        %v1246 = vmul.f32 %v1241, %v1245
        %vm1247 = vweird.f32 %v1230
        %vm1248 = vweird.f32 %v1241
        %vm1249 = vmor %vm1247, %vm1248
        %v1250 = vsel %vm1249, %v1241, %v1246
        %v1251 = vmul.f32 %v1201, %v1240
        %v1252 = vmul.f32 %v1202, %v1240
        %v1253 = vmul.f32 %v1203, %v1240
        %v1254 = vmul.f32 %v1204, %v1240
        %v1255 = vmul.f32 %v1205, %v1250
        %v1256 = vmul.f32 %v1206, %v1250
        %v1257 = vmul.f32 %v1207, %v1250
        %v1258 = vmul.f32 %v1208, %v1250
        %v1259 = vxor.u32 %v1251, 2147483648
        %v1260 = vxor.u32 %v1252, 2147483648
        %v1261 = vxor.u32 %v1253, 2147483648
        %v1262 = vxor.u32 %v1254, 2147483648
        %v1263 = vxor.u32 %v1255, 2147483648
        %v1264 = vxor.u32 %v1256, 2147483648
        %v1265 = vxor.u32 %v1257, 2147483648
        %v1266 = vxor.u32 %v1258, 2147483648
        %v1267 = vmul.f32 %v1259, 1.442695
        %v1268 = vpow.pop %v1267
        %v1269 = vmul.f32 %v1260, 1.442695
        %v1270 = vpow.pop %v1269
        %v1271 = vmul.f32 %v1261, 1.442695
        %v1272 = vpow.pop %v1271
        %v1273 = vmul.f32 %v1262, 1.442695
        %v1274 = vpow.pop %v1273
        %v1275 = vmul.f32 %v1263, 1.442695
        %v1276 = vpow.pop %v1275
        %v1277 = vmul.f32 %v1264, 1.442695
        %v1278 = vpow.pop %v1277
        %v1279 = vmul.f32 %v1265, 1.442695
        %v1280 = vpow.pop %v1279
        %v1281 = vmul.f32 %v1266, 1.442695
        %v1282 = vpow.pop %v1281
        %v1283 = vadd.f32 %v1268, 1.0
        %v1284 = vadd.f32 %v1270, 1.0
        %v1285 = vadd.f32 %v1272, 1.0
        %v1286 = vadd.f32 %v1274, 1.0
        %v1287 = vadd.f32 %v1276, 1.0
        %v1288 = vadd.f32 %v1278, 1.0
        %v1289 = vadd.f32 %v1280, 1.0
        %v1290 = vadd.f32 %v1282, 1.0
        %v1291 = vrcp.pop %v1283
        %v1292 = vmul.f32 %v1283, %v1291
        %v1293 = vsub.f32 1.0, %v1292
        %v1294 = vmul.f32 %v1291, %v1293
        %v1295 = vadd.f32 %v1291, %v1294
        %vm1296 = vweird.f32 %v1283
        %vm1297 = vweird.f32 %v1291
        %vm1298 = vmor %vm1296, %vm1297
        %v1299 = vsel %vm1298, %v1291, %v1295
        %v1300 = vand.u32 2147483647, %v1283
        %vm1301 = vcmp.eq.f32.partialorder %v1300, 8.507059e+37
        %v1302 = vand.u32 %v1283, 2147483648
        %v1303 = vor.u32 1.1754944e-38, %v1302
        %v1304 = vsel %vm1301, %v1303, %v1299
        %v1305 = vmul.f32 1.0, %v1304
        %v1306 = vrcp.pop %v1284
        %v1307 = vmul.f32 %v1284, %v1306
        %v1308 = vsub.f32 1.0, %v1307
        %v1309 = vmul.f32 %v1306, %v1308
        %v1310 = vadd.f32 %v1306, %v1309
        %vm1311 = vweird.f32 %v1284
        %vm1312 = vweird.f32 %v1306
        %vm1313 = vmor %vm1311, %vm1312
        %v1314 = vsel %vm1313, %v1306, %v1310
        %v1315 = vand.u32 2147483647, %v1284
        %vm1316 = vcmp.eq.f32.partialorder %v1315, 8.507059e+37
        %v1317 = vand.u32 %v1284, 2147483648
        %v1318 = vor.u32 1.1754944e-38, %v1317
        %v1319 = vsel %vm1316, %v1318, %v1314
        %v1320 = vmul.f32 1.0, %v1319
        %v1321 = vrcp.pop %v1285
        %v1322 = vmul.f32 %v1285, %v1321
        %v1323 = vsub.f32 1.0, %v1322
        %v1324 = vmul.f32 %v1321, %v1323
        %v1325 = vadd.f32 %v1321, %v1324
        %vm1326 = vweird.f32 %v1285
        %vm1327 = vweird.f32 %v1321
        %vm1328 = vmor %vm1326, %vm1327
        %v1329 = vsel %vm1328, %v1321, %v1325
        %v1330 = vand.u32 2147483647, %v1285
        %vm1331 = vcmp.eq.f32.partialorder %v1330, 8.507059e+37
        %v1332 = vand.u32 %v1285, 2147483648
        %v1333 = vor.u32 1.1754944e-38, %v1332
        %v1334 = vsel %vm1331, %v1333, %v1329
        %v1335 = vmul.f32 1.0, %v1334
        %v1336 = vrcp.pop %v1286
        %v1337 = vmul.f32 %v1286, %v1336
        %v1338 = vsub.f32 1.0, %v1337
        %v1339 = vmul.f32 %v1336, %v1338
        %v1340 = vadd.f32 %v1336, %v1339
        %vm1341 = vweird.f32 %v1286
        %vm1342 = vweird.f32 %v1336
        %vm1343 = vmor %vm1341, %vm1342
        %v1344 = vsel %vm1343, %v1336, %v1340
        %v1345 = vand.u32 2147483647, %v1286
        %vm1346 = vcmp.eq.f32.partialorder %v1345, 8.507059e+37
        %v1347 = vand.u32 %v1286, 2147483648
        %v1348 = vor.u32 1.1754944e-38, %v1347
        %v1349 = vsel %vm1346, %v1348, %v1344
        %v1350 = vmul.f32 1.0, %v1349
        %v1351 = vrcp.pop %v1287
        %v1352 = vmul.f32 %v1287, %v1351
        %v1353 = vsub.f32 1.0, %v1352
        %v1354 = vmul.f32 %v1351, %v1353
        %v1355 = vadd.f32 %v1351, %v1354
        %vm1356 = vweird.f32 %v1287
        %vm1357 = vweird.f32 %v1351
        %vm1358 = vmor %vm1356, %vm1357
        %v1359 = vsel %vm1358, %v1351, %v1355
        %v1360 = vand.u32 2147483647, %v1287
        %vm1361 = vcmp.eq.f32.partialorder %v1360, 8.507059e+37
        %v1362 = vand.u32 %v1287, 2147483648
        %v1363 = vor.u32 1.1754944e-38, %v1362
        %v1364 = vsel %vm1361, %v1363, %v1359
        %v1365 = vmul.f32 1.0, %v1364
        %v1366 = vrcp.pop %v1288
        %v1367 = vmul.f32 %v1288, %v1366
        %v1368 = vsub.f32 1.0, %v1367
        %v1369 = vmul.f32 %v1366, %v1368
        %v1370 = vadd.f32 %v1366, %v1369
        %vm1371 = vweird.f32 %v1288
        %vm1372 = vweird.f32 %v1366
        %vm1373 = vmor %vm1371, %vm1372
        %v1374 = vsel %vm1373, %v1366, %v1370
        %v1375 = vand.u32 2147483647, %v1288
        %vm1376 = vcmp.eq.f32.partialorder %v1375, 8.507059e+37
        %v1377 = vand.u32 %v1288, 2147483648
        %v1378 = vor.u32 1.1754944e-38, %v1377
        %v1379 = vsel %vm1376, %v1378, %v1374
        %v1380 = vmul.f32 1.0, %v1379
        %v1381 = vrcp.pop %v1289
        %v1382 = vmul.f32 %v1289, %v1381
        %v1383 = vsub.f32 1.0, %v1382
        %v1384 = vmul.f32 %v1381, %v1383
        %v1385 = vadd.f32 %v1381, %v1384
        %vm1386 = vweird.f32 %v1289
        %vm1387 = vweird.f32 %v1381
        %vm1388 = vmor %vm1386, %vm1387
        %v1389 = vsel %vm1388, %v1381, %v1385
        %v1390 = vand.u32 2147483647, %v1289
        %vm1391 = vcmp.eq.f32.partialorder %v1390, 8.507059e+37
        %v1392 = vand.u32 %v1289, 2147483648
        %v1393 = vor.u32 1.1754944e-38, %v1392
        %v1394 = vsel %vm1391, %v1393, %v1389
        %v1395 = vmul.f32 1.0, %v1394
        %v1396 = vrcp.pop %v1290
        %v1397 = vmul.f32 %v1290, %v1396
        %v1398 = vsub.f32 1.0, %v1397
        %v1399 = vmul.f32 %v1396, %v1398
        %v1400 = vadd.f32 %v1396, %v1399
        %vm1401 = vweird.f32 %v1290
        %vm1402 = vweird.f32 %v1396
        %vm1403 = vmor %vm1401, %vm1402
        %v1404 = vsel %vm1403, %v1396, %v1400
        %v1405 = vand.u32 2147483647, %v1290
        %vm1406 = vcmp.eq.f32.partialorder %v1405, 8.507059e+37
        %v1407 = vand.u32 %v1290, 2147483648
        %v1408 = vor.u32 1.1754944e-38, %v1407
        %v1409 = vsel %vm1406, %v1408, %v1404
        %v1410 = vmul.f32 1.0, %v1409
        %v1411 = vmul.f32 %v1251, %v1305
        %v1412 = vmul.f32 %v1252, %v1320
        %v1413 = vmul.f32 %v1253, %v1335
        %v1414 = vmul.f32 %v1254, %v1350
        %v1415 = vmul.f32 %v1255, %v1365
        %v1416 = vmul.f32 %v1256, %v1380
        %v1417 = vmul.f32 %v1257, %v1395
        %v1418 = vmul.f32 %v1258, %v1410
        %v1419 = vunpack.c.l.bf16 %v579
        %v1420 = vunpack.c.h.bf16 %v579
        %v1421 = vunpack.c.l.bf16 %v580
        %v1422 = vunpack.c.h.bf16 %v580
        %v1423 = vunpack.c.l.bf16 %v581
        %v1424 = vunpack.c.h.bf16 %v581
        %v1425 = vunpack.c.l.bf16 %v582
        %v1426 = vunpack.c.h.bf16 %v582
        %v1427 = vadd.f32 %v1419, %v1411
        %v1428 = vadd.f32 %v1420, %v1412
        %v1429 = vadd.f32 %v1421, %v1413
        %v1430 = vadd.f32 %v1422, %v1414
        %v1431 = vadd.f32 %v1423, %v1415
        %v1432 = vadd.f32 %v1424, %v1416
        %v1433 = vadd.f32 %v1425, %v1417
        %v1434 = vadd.f32 %v1426, %v1418
        %v1435 = vadd.f32 %v1427, %v1428
        %v1436 = vadd.f32 %v1435, %v1429
        %v1437 = vadd.f32 %v1436, %v1430
        %1438 = vadd.xlane.f32.xlu0 %v1437
        %v1439 = vpop.xlane.xlu0 %1438
        %v1440 = vadd.f32 %v1431, %v1432
        %v1441 = vadd.f32 %v1440, %v1433
        %v1442 = vadd.f32 %v1441, %v1434
        %1443 = vadd.xlane.f32.xlu0 %v1442
        %v1444 = vpop.xlane.xlu0 %1443
        %v1445 = vmul.f32 %v1439, 0.001953125
        %v1446 = vmul.f32 %v1444, 0.001953125
        %v1448 = vsel %vm607, %v555, 0
        %v1451 = vsel %vm607, %v556, 0
        %v1454 = vsel %vm607, %v557, 0
        %v1457 = vsel %vm607, %v558, 0
        %1459 = vmatpush.msra.mxu0 0.0
        %1460 = vmatpush.msra.mxu0 0.0
        %1461 = vmatpush.msra.mxu0 0.0
        %1462 = vmatpush.msra.mxu0 0.0
        %1463 = vmatpush.msra.mxu0 0.0
        %1464 = vmatpush.msra.mxu0 0.0
        %1465 = vmatpush.msra.mxu0 0.0
        %1466 = vmatpush.msra.mxu0 0.0
        %1467 = vmatpush.msra.mxu0 0.0
        %1468 = vmatpush.msra.mxu0 0.0
        %1469 = vmatpush.msra.mxu0 0.0
        %1470 = vmatpush.msra.mxu0 0.0
        %1471 = vmatpush.msra.mxu0 0.0
        %1472 = vmatpush.msra.mxu0 0.0
        %1473 = vmatpush.msra.mxu0 %v1446
        %1474 = vmatpush.msra.mxu0 %v1445
        %1475 = vmatmul.f32.gmra.mxu0 %v1448
        %v1476 = vpop.f32.mrf.mxu0
        %v1477 = vadd.f32 %v559, %v1476
        %1478 = vmatmul.f32.gmra.mxu0 %v1451
        %v1479 = vpop.f32.mrf.mxu0
        %v1480 = vadd.f32 %v560, %v1479
        %1481 = vmatmul.f32.gmra.mxu0 %v1454
        %v1482 = vpop.f32.mrf.mxu0
        %v1483 = vadd.f32 %v561, %v1482
        %1484 = vmatmul.f32.gmra.mxu0 %v1457
        %v1485 = vpop.f32.mrf.mxu0
        %v1486 = vadd.f32 %v562, %v1485
        %1487 = vdwg.mxu0
        %vm1488 = vcmask 7168
        %v1489 = vsel %vm1488, %v1477, 0.0
        %v1490 = vsel %vm1488, %v1480, 0.0
        %v1491 = vadd.f32 %v1489, %v1490
        %v1492 = vsel %vm1488, %v1483, 0.0
        %v1493 = vadd.f32 %v1491, %v1492
        %v1494 = vsel %vm1488, %v1486, 0.0
        %v1495 = vadd.f32 %v1493, %v1494
        %v1496 = vrot.slane %v1495, 4
        %v1497 = vadd.f32 %v1495, %v1496
        %v1498 = vrot.slane %v1497, 2
        %v1499 = vadd.f32 %v1497, %v1498
        %v1500 = vrot.slane %v1499, 1
        %v1501 = vadd.f32 %v1499, %v1500
        %v1502 = vrcp.pop 32.0
        %v1503 = vmul.f32 32.0, %v1502
        %v1504 = vsub.f32 1.0, %v1503
        %v1505 = vmul.f32 %v1502, %v1504
        %v1506 = vadd.f32 %v1502, %v1505
        %vm1507 = vweird.f32 %v1502
        %v1508 = vsel %vm1507, %v1502, %v1506
        %v1509 = vmul.f32 %v1501, %v1508
        %v1510 = vsub.f32 %v1477, %v1509
        %v1511 = vsub.f32 %v1480, %v1509
        %v1512 = vsub.f32 %v1483, %v1509
        %v1513 = vsub.f32 %v1486, %v1509
        %v1514 = vmul.f32 %v1510, %v1510
        %v1515 = vmul.f32 %v1511, %v1511
        %v1516 = vmul.f32 %v1512, %v1512
        %v1517 = vmul.f32 %v1513, %v1513
        %v1518 = vsel %vm1488, %v1514, 0.0
        %v1519 = vsel %vm1488, %v1515, 0.0
        %v1520 = vadd.f32 %v1518, %v1519
        %v1521 = vsel %vm1488, %v1516, 0.0
        %v1522 = vadd.f32 %v1520, %v1521
        %v1523 = vsel %vm1488, %v1517, 0.0
        %v1524 = vadd.f32 %v1522, %v1523
        %v1525 = vrot.slane %v1524, 4
        %v1526 = vadd.f32 %v1524, %v1525
        %v1527 = vrot.slane %v1526, 2
        %v1528 = vadd.f32 %v1526, %v1527
        %v1529 = vrot.slane %v1528, 1
        %v1530 = vadd.f32 %v1528, %v1529
        %v1531 = vmul.f32 %v1530, %v1508
        %v1532 = vadd.f32 %v1531, 1e-05
        %v1533 = vrsqrt.pop %v1532
        %v1534 = vmul.f32 %v1533, %v1532
        %v1535 = vmul.f32 %v1534, %v1533
        %v1536 = vmul.f32 0.5, %v1535
        %v1537 = vsub.f32 1.5, %v1536
        %v1538 = vmul.f32 %v1533, %v1537
        %vm1539 = vweird.f32 %v1532
        %vm1540 = vweird.f32 %v1533
        %vm1541 = vmor %vm1539, %vm1540
        %v1542 = vsel %vm1541, %v1533, %v1538
        %v1543 = vmul.f32 %v1510, %v1542
        %v1544 = vmul.f32 %v1511, %v1542
        %v1545 = vmul.f32 %v1512, %v1542
        %v1546 = vmul.f32 %v1513, %v1542
        %v1547 = vmul.f32 %v1543, %v563
        %v1548 = vmul.f32 %v1544, %v564
        %v1549 = vmul.f32 %v1545, %v565
        %v1550 = vmul.f32 %v1546, %v566
        %v1551 = vadd.f32 %v1547, %v567
        %v1552 = vadd.f32 %v1548, %v568
        %v1553 = vadd.f32 %v1549, %v569
        %v1554 = vadd.f32 %v1550, %v570
        %v1555 = vmax.f32 %v1551, 0.0
        %v1556 = vmax.f32 %v1552, 0.0
        %v1557 = vmax.f32 %v1553, 0.0
        %v1558 = vmax.f32 %v1554, 0.0
        %vm1559 = vcmask 261120
        %v1561 = vsel %vm1559, %v571, 0
        %v1564 = vsel %vm1559, %v572, 0
        %v1567 = vsel %vm1559, %v573, 0
        %v1570 = vsel %vm1559, %v574, 0
        %1572 = vmatpush.msra.mxu0 0.0
        %1573 = vmatpush.msra.mxu0 0.0
        %1574 = vmatpush.msra.mxu0 0.0
        %1575 = vmatpush.msra.mxu0 0.0
        %1576 = vmatpush.msra.mxu0 0.0
        %1577 = vmatpush.msra.mxu0 0.0
        %1578 = vmatpush.msra.mxu0 0.0
        %1579 = vmatpush.msra.mxu0 0.0
        %1580 = vmatpush.msra.mxu0 0.0
        %1581 = vmatpush.msra.mxu0 0.0
        %1582 = vmatpush.msra.mxu0 0.0
        %1583 = vmatpush.msra.mxu0 0.0
        %1584 = vmatpush.msra.mxu0 %v1558
        %1585 = vmatpush.msra.mxu0 %v1557
        %1586 = vmatpush.msra.mxu0 %v1556
        %1587 = vmatpush.msra.mxu0 %v1555
        %1588 = vmatmul.f32.gmra.mxu0 %v1561
        %v1589 = vpop.f32.mrf.mxu0
        %v1590 = vadd.f32 %v575, %v1589
        %1591 = vmatmul.f32.gmra.mxu0 %v1564
        %v1592 = vpop.f32.mrf.mxu0
        %v1593 = vadd.f32 %v576, %v1592
        %1594 = vmatmul.f32.gmra.mxu0 %v1567
        %v1595 = vpop.f32.mrf.mxu0
        %v1596 = vadd.f32 %v577, %v1595
        %1597 = vmatmul.f32.gmra.mxu0 %v1570
        %v1598 = vpop.f32.mrf.mxu0
        %v1599 = vadd.f32 %v578, %v1598
        %1600 = vdwg.mxu0
        %v1601 = vmax.f32 %v1590, %v1596
        %v1602 = vmax.f32 %v1593, %v1599
        %v1603 = vsub.f32 %v1590, %v1601
        %v1604 = vsub.f32 %v1593, %v1602
        %v1605 = vmul.f32 %v1603, 1.442695
        %v1606 = vpow.pop %v1605
        %v1607 = vmul.f32 %v1604, 1.442695
        %v1608 = vpow.pop %v1607
        %v1609 = vsub.f32 %v1596, %v1601
        %v1610 = vsub.f32 %v1599, %v1602
        %v1611 = vmul.f32 %v1609, 1.442695
        %v1612 = vpow.pop %v1611
        %v1613 = vmul.f32 %v1610, 1.442695
        %v1614 = vpow.pop %v1613
        %v1615 = vadd.f32 %v1606, %v1612
        %v1616 = vadd.f32 %v1608, %v1614
        %v1617 = vrcp.pop %v1615
        %v1618 = vrcp.pop %v1616
        %v1619 = vmul.f32 %v1606, %v1617
        %v1620 = vmul.f32 %v1608, %v1618
        %1622 = vset.pattern.permute.xlu0 0
        %1623 = vperm.xlu0 %1622, %v1619
        %v1624 = vpop.permute.xlu0 %1623
        %1627 = vset.pattern.permute.xlu0 0
        %1628 = vperm.xlu0 %1627, %v1620
        %v1629 = vpop.permute.xlu0 %1628
        %v1631 = vmul.f32 %v1419, %v1624
        %v1632 = vmul.f32 %v1420, %v1624
        %v1633 = vmul.f32 %v1421, %v1624
        %v1634 = vmul.f32 %v1422, %v1624
        %v1635 = vmul.f32 %v1423, %v1629
        %v1636 = vmul.f32 %v1424, %v1629
        %v1637 = vmul.f32 %v1425, %v1629
        %v1638 = vmul.f32 %v1426, %v1629
        %v1639 = vmul.f32 %v1612, %v1617
        %v1640 = vmul.f32 %v1614, %v1618
        %1642 = vset.pattern.permute.xlu0 0
        %1643 = vperm.xlu0 %1642, %v1639
        %v1644 = vpop.permute.xlu0 %1643
        %1647 = vset.pattern.permute.xlu0 0
        %1648 = vperm.xlu0 %1647, %v1640
        %v1649 = vpop.permute.xlu0 %1648
        %v1651 = vmul.f32 %v1411, %v1644
        %v1652 = vmul.f32 %v1412, %v1644
        %v1653 = vmul.f32 %v1413, %v1644
        %v1654 = vmul.f32 %v1414, %v1644
        %v1655 = vmul.f32 %v1415, %v1649
        %v1656 = vmul.f32 %v1416, %v1649
        %v1657 = vmul.f32 %v1417, %v1649
        %v1658 = vmul.f32 %v1418, %v1649
        %v1659 = vadd.f32 %v1631, %v1651
        %v1660 = vadd.f32 %v1632, %v1652
        %v1661 = vadd.f32 %v1633, %v1653
        %v1662 = vadd.f32 %v1634, %v1654
        %v1663 = vadd.f32 %v1635, %v1655
        %v1664 = vadd.f32 %v1636, %v1656
        %v1665 = vadd.f32 %v1637, %v1657
        %v1666 = vadd.f32 %v1638, %v1658
        %v1667 = vpack.c.bf16 %v1660, %v1659
        %v1668 = vpack.c.bf16 %v1662, %v1661
        %v1669 = vpack.c.bf16 %v1664, %v1663
        %v1670 = vpack.c.bf16 %v1666, %v1665
        %1671 = vst [vmem:[%s529] sm:$0xff] %v1667
        %1672 = vst [vmem:[%s529 + $0x8] sm:$0xff] %v1668
        %1673 = vst [vmem:[%s529 + $0x10] sm:$0xff] %v1669
        %1674 = vst [vmem:[%s529 + $0x18] sm:$0xff] %v1670
        %s1675 = sand.u32 %s384, 1
        %s1676 = scalar_lea.sflag [#allocation3], %s1675
        %s1677 = sand.u32 %s384, 1
        %s1678 = smul.addr %s1677, 32
        %s1679 = scalar_lea.vmem [#allocation2], %s1678
        // Predicated region
        $region85: #{tpu_custom_call.1} parent=83 // pred_check
          %p1680 = pneg %p394
        $region86: #{tpu_custom_call.1} parent=83 // pred_check_branch
          %1682 = sbr.rel (%p1680) target = $region88
        $region87: #{tpu_custom_call.1} parent=83 // pred_region
          %1684 = vsyncadd %s1676, 0
          %s1685 = smul.addr %s30, 8
          %s1686 = smul.addr %s1685, 4
          %s1687 = scalar_lea.hbm %s16, %s1686
          %s1688 = sshll.u32 %s1679, 4
          %s1689 = int_to_ptr.vmem [resolvable:$true] %s1688
          %s1690 = sshll.u32 %s1687, 4
          %s1691 = int_to_ptr.hbm [resolvable:$true] %s1690
          %1696 = dma.vmem_to_hbm [thread:$0]  %s1689, 512, %s1691, %s1676, 256, 256, 16
        $region88: #{tpu_custom_call.1} parent=83 // pred_fallthru
          _
      $region84: #{tpu_custom_call.1} parent=5 // pred_fallthru
        _
      %p1697 = scmp.le.s32.totalorder 2, %s25
      // Predicated region
      $region89: #{tpu_custom_call.1} parent=5 // pred_check
        %p1698 = pneg %p1697
      $region90: #{tpu_custom_call.1} parent=5 // pred_check_branch
        %1700 = sbr.rel (%p1698) target = $region92
      $region91: #{tpu_custom_call.1} parent=5 // pred_region
        %s1701 = ssub.s32 %s25, 2
        // Predicated region
        $region93: #{tpu_custom_call.1} parent=91 // pred_check
          %p1702 = pneg %p400
        $region94: #{tpu_custom_call.1} parent=91 // pred_check_branch
          %1704 = sbr.rel (%p1702) target = $region96
        $region95: #{tpu_custom_call.1} parent=91 // pred_region
          %s1705 = sand.u32 %s385, 1
          %s1706 = scalar_lea.sflag [#allocation3], %s1705
          %s1707 = sand.u32 %s385, 1
          %s1708 = smul.addr %s1707, 32
          %s1709 = scalar_lea.vmem [#allocation2], %s1708
          %1711 = dma.done %s1706, 512
        $region96: #{tpu_custom_call.1} parent=91 // pred_fallthru
          _
      $region92: #{tpu_custom_call.1} parent=5 // pred_fallthru
        _
    $region6: #{tpu_custom_call.1} parent=1 // loop_footer
      %s29 = sadd.s32 1, %s25
    $region7: #{tpu_custom_call.1} parent=1 // loop_footer_branch
      %24 = sbr.rel target = $region3
    $region8: #{tpu_custom_call.1} parent=1 // loop_exit
      _
    %1712 = vsyncpa [#allocation3], 1
    %s1713 = scalar_lea.sflag [#allocation3], 1
    %1714 = vsyncpa %s1713, 1

</llo_original>
